<compile_context>
chip_gen: v5e
topology: v5e:2x2
jax: 0.10.0
libtpu: 0.0.40
codegen_flags: <defaults>
</compile_context>

<pallas_src>
import jax
import jax.numpy as jnp
import numpy as np
from jax.experimental import pallas as pl
from jax.experimental.pallas import tpu as pltpu

_HIGHEST = jax.lax.Precision.HIGHEST


def _round_up(x, m):
    return ((x + m - 1) // m) * m


def _num_tensorcores():
    """Best-effort TensorCores-per-chip (megacore chips = 2, else 1). Only affects tiling."""
    try:
        kind = jax.devices()[0].device_kind.lower()
    except Exception:
        return 1
    for tag in ("v7", "v5p", "v4"):
        if tag in kind:
            return 2
    return 1


def _vmem_capacity_bytes():
    """Physical VMEM per TensorCore; conservative fallback = v7x's 64 MiB."""
    try:
        cap = getattr(pltpu.get_tpu_info(), "vmem_capacity_bytes", None)
        if cap:
            return int(cap)
    except Exception:
        pass
    return 64 * 1024 * 1024


def _tile_vmem_bytes(n_tile, T, G, H, F_pad):
    """Rough live-set estimate for one grid program (double-buffered blocks + scratch)."""
    f32 = 4
    xw_blk = 2 * T * n_tile * G * f32          # input block (double-buffered)
    dec_blk = 2 * T * n_tile * F_pad * f32     # dec output block (double-buffered)
    emb_blk = 2 * n_tile * H * f32             # emb output block
    hdec = T * n_tile * H * f32                # decoder hidden-state scratch
    fc_val = T * n_tile * F_pad * f32          # bulk fc result value
    weights = 2 * (2 * H * G + G + H * F_pad + F_pad) * f32
    return xw_blk + dec_blk + emb_blk + hdec + fc_val + weights


def _samaf_kernel(xw_ref, whh_ref, whhd_ref, bd_ref, fcw_ref, fcb_ref,
                  emb_ref, dec_ref, hdec_sc):
    T, Nt, G = xw_ref.shape         # G = 4*H ; xw = X @ W_ih + bias (precomputed)
    H = whh_ref.shape[0]
    F_pad = fcw_ref.shape[1]
    mm = jnp.bfloat16               # MXU operand dtype; accumulation stays f32

    whh = whh_ref[...].astype(mm)           # encoder recurrence weights
    whh_d = whhd_ref[...].astype(mm)        # decoder recurrence weights (feedback folded)
    b_dec = bd_ref[...]                     # decoder folded bias (f32, (1, 4H))

    def lstm_step(pre, h, c, w_hh):
        # pre: precomputed input contribution (+ bias): (Nt, 4H) or (1, 4H) broadcast.
        gates = pre + jnp.dot(h.astype(mm), w_hh, preferred_element_type=jnp.float32)
        # exactly 4H lanes of transcendentals (sigmoid on i,f and o; tanh on g)
        i_f = jax.nn.sigmoid(gates[:, :2 * H])
        g = jnp.tanh(gates[:, 2 * H:3 * H])
        o = jax.nn.sigmoid(gates[:, 3 * H:])
        c_new = i_f[:, H:] * c + i_f[:, :H] * g
        h_new = o * jnp.tanh(c_new)
        return h_new, c_new

    h = jnp.zeros((Nt, H), jnp.float32)     # PyTorch zero initial state
    c = jnp.zeros((Nt, H), jnp.float32)

    # ---------------- encoder: only h @ W_hh stays on the per-step critical path ------------
    def enc_step(t, carry):
        hh, cc = carry
        return lstm_step(xw_ref[t], hh, cc, whh)

    if T <= 16:                             # short trip count: full static unroll
        for t in range(T):
            h, c = enc_step(t, (h, c))
    else:                                   # large T: bound live ranges / code size
        h, c = jax.lax.fori_loop(0, T, enc_step, (h, c))
    emb_ref[...] = h                        # embeddings = final hidden state

    # ---------------- decoder: autoregressive, seeded with last input frame ------------------
    # step 0: input = x[:, T-1, :] -> its projection (+bias) is the last xw slab
    h, c = lstm_step(xw_ref[T - 1], h, c, whh)
    hdec_sc[pl.ds(0, Nt), :] = h

    def dec_step(start, carry):
        hh, cc = carry
        hh, cc = lstm_step(b_dec, hh, cc, whh_d)   # folded feedback: ONE dependent matmul
        hdec_sc[pl.ds(start, Nt), :] = hh
        return hh, cc

    if T <= 16:
        for t in range(1, T):
            h, c = dec_step(t * Nt, (h, c))
    else:
        h, c = jax.lax.fori_loop(
            1, T, lambda t, carry: dec_step(pl.multiple_of(t * Nt, Nt), carry), (h, c))

    # one bulk (T*Nt, H) x (H, F_pad) fc matmul + single lane-dense store
    dec = (jnp.dot(hdec_sc[...].astype(mm), fcw_ref[...].astype(mm),
                   preferred_element_type=jnp.float32) + fcb_ref[...])
    dec_ref[...] = dec.reshape(T, Nt, F_pad)


def samaf_pallas(X, params, n_tile=None):
    """X: (batch, mfcc_blocks, seq, n_features). Returns (embeddings, decoder_outputs)."""
    wih, whh, bias, fcw, fcb = params
    batch, blocks, T, F = X.shape
    H = whh.shape[0]
    G = 4 * H
    N = batch * blocks
    F_pad = _round_up(F, 128)               # lane-dense decoder output / fc weights

    n_cores = _num_tensorcores()
    vmem_cap = _vmem_capacity_bytes()

    if n_tile is None:
        # One program per TensorCore (grid is a serial loop on a single TC; extra programs
        # just replay the 2T-step serial chain), shrunk only if the tile busts VMEM.
        n_tile = _round_up(pl.cdiv(N, n_cores), 8)
        budget = (vmem_cap * 3) // 4
        while n_tile > 8 and _tile_vmem_bytes(n_tile, T, G, H, F_pad) > budget:
            n_tile = _round_up(n_tile // 2, 8)
    n_tile = _round_up(n_tile, 8)
    N_pad = _round_up(N, n_tile)
    grid = (N_pad // n_tile,)

    vmem_limit = int(min(vmem_cap,
                         max(32 * 1024 * 1024,
                             _tile_vmem_bytes(n_tile, T, G, H, F_pad) + (8 << 20))))

    # (batch, blocks, T, F) -> time-major (T, N_pad, F); one bulk input projection for ALL
    # encoder steps done here in XLA (off the kernel's serial critical path, lane-dense 4H).
    Xt = jnp.transpose(X.reshape(N, T, F).astype(jnp.float32), (1, 0, 2))
    if N_pad != N:
        Xt = jnp.pad(Xt, ((0, 0), (0, N_pad - N), (0, 0)))
    xw = jnp.einsum("tnf,fg->tng", Xt, wih, precision=_HIGHEST) + bias   # (T, N_pad, 4H)

    # decoder feedback fold (computed once, outside the kernel, in f32)
    whh_dec = whh + jnp.dot(fcw, wih, precision=_HIGHEST)
    bias_dec = bias + jnp.dot(fcb, wih, precision=_HIGHEST)

    # lane-dense fc head (pad to 128 lanes; padded columns produce zeros, sliced off below)
    fcw_p = jnp.pad(fcw, ((0, 0), (0, F_pad - F)))
    fcb_p = jnp.pad(fcb, ((0, 0), (0, F_pad - F)))

    flops = int(2 * N_pad * T * H * G          # encoder recurrence
                + 2 * N_pad * T * H * G        # decoder recurrence (folded)
                + 2 * N_pad * T * H * F_pad)   # bulk decoder fc
    transcendentals = int(2 * T * N_pad * 5 * H)
    bytes_accessed = int(4 * (T * N_pad * G                  # xw in
                              + N_pad * H + T * N_pad * F_pad  # outputs
                              + 2 * H * G + 2 * G              # recurrence weights/biases
                              + H * F_pad + F_pad))            # fc weights

    emb, dec = pl.pallas_call(
        _samaf_kernel,
        out_shape=(jax.ShapeDtypeStruct((N_pad, H), jnp.float32),
                   jax.ShapeDtypeStruct((T, N_pad, F_pad), jnp.float32)),
        grid=grid,
        in_specs=[
            pl.BlockSpec((T, n_tile, G), lambda i: (0, i, 0)),   # xw (time-major, lane-dense)
            pl.BlockSpec((H, G), lambda i: (0, 0)),              # W_hh
            pl.BlockSpec((H, G), lambda i: (0, 0)),              # W_hh + fcW @ W_ih (decoder)
            pl.BlockSpec((1, G), lambda i: (0, 0)),              # bias + fc_b @ W_ih (decoder)
            pl.BlockSpec((H, F_pad), lambda i: (0, 0)),          # fc.W^T (lane-padded)
            pl.BlockSpec((1, F_pad), lambda i: (0, 0)),          # fc.b  (lane-padded)
        ],
        out_specs=(pl.BlockSpec((n_tile, H), lambda i: (i, 0)),
                   pl.BlockSpec((T, n_tile, F_pad), lambda i: (0, i, 0))),
        scratch_shapes=[pltpu.VMEM((T * n_tile, H), jnp.float32)],
        compiler_params=pltpu.CompilerParams(
            dimension_semantics=("parallel",),
            vmem_limit_bytes=vmem_limit),
        cost_estimate=pl.CostEstimate(flops=flops,
                                      transcendentals=transcendentals,
                                      bytes_accessed=bytes_accessed),
    )(xw, whh, whh_dec, bias_dec, fcw_p, fcb_p)

    embeddings = emb[:N].reshape(batch, blocks, H)
    decoder_outputs = jnp.transpose(dec[:, :N, :F], (1, 0, 2)).reshape(batch, blocks, T, F)
    return embeddings, decoder_outputs


def samaf_reference(X, params):
    """Pure-NumPy float64 reference with identical PyTorch LSTM semantics."""
    wih, whh, bias, fcw, fcb = (np.asarray(p, dtype=np.float64) for p in params)
    X = np.asarray(X, dtype=np.float64)
    batch, blocks, T, F = X.shape
    H = whh.shape[0]
    N = batch * blocks
    x = X.reshape(N, T, F)

    def sigmoid(v):
        return 1.0 / (1.0 + np.exp(-v))

    def step(h, c, xt):
        g = xt @ wih + h @ whh + bias
        i = sigmoid(g[:, :H])
        f = sigmoid(g[:, H:2 * H])
        gg = np.tanh(g[:, 2 * H:3 * H])
        o = sigmoid(g[:, 3 * H:])
        c = f * c + i * gg
        h = o * np.tanh(c)
        return h, c

    h = np.zeros((N, H))
    c = np.zeros((N, H))
    for t in range(T):
        h, c = step(h, c, x[:, t, :])
    emb = h.copy()
    dec_in = x[:, T - 1, :]
    outs = []
    for _ in range(T):
        h, c = step(h, c, dec_in)
        out = h @ fcw + fcb
        outs.append(out)
        dec_in = out
    dec = np.stack(outs, axis=1)
    return emb.reshape(batch, blocks, H), dec.reshape(batch, blocks, T, F)


def init_params(key, n_features, hidden):
    """Deterministic init mimicking PyTorch's U(-1/sqrt(H), 1/sqrt(H))."""
    k = 1.0 / np.sqrt(hidden)
    ks = jax.random.split(key, 6)
    wih = jax.random.uniform(ks[0], (n_features, 4 * hidden), jnp.float32, -k, k)
    whh = jax.random.uniform(ks[1], (hidden, 4 * hidden), jnp.float32, -k, k)
    b_ih = jax.random.uniform(ks[2], (4 * hidden,), jnp.float32, -k, k)
    b_hh = jax.random.uniform(ks[3], (4 * hidden,), jnp.float32, -k, k)
    bias = (b_ih + b_hh).reshape(1, 4 * hidden)
    fcw = jax.random.uniform(ks[4], (hidden, n_features), jnp.float32, -k, k)
    fcb = jax.random.uniform(ks[5], (n_features,), jnp.float32, -k, k).reshape(1, n_features)
    return wih, whh, bias, fcw, fcb


if __name__ == "__main__":
    # (batch, mfcc_blocks, seq_length, n_features); hidden = embedding_dim
    batch, blocks, seq, n_features, hidden = 2, 8, 8, 13, 32

    key = jax.random.PRNGKey(0)
    kx, kp = jax.random.split(key)
    X = jax.random.normal(kx, (batch, blocks, seq, n_features), jnp.float32)
    params = init_params(kp, n_features, hidden)

    fwd = jax.jit(samaf_pallas)
    emb, dec = fwd(X, params)
    jax.block_until_ready((emb, dec))

    emb_ref, dec_ref = samaf_reference(X, params)
    assert emb.shape == (batch, blocks, hidden)
    assert dec.shape == (batch, blocks, seq, n_features)
    # bf16 MXU operands (f32 state/accumulation) over a 2T-step recurrence:
    # typical error ~1e-3 at these sizes; 5e-2 is the bf16-appropriate bound.
    np.testing.assert_allclose(np.asarray(emb), emb_ref, rtol=5e-2, atol=5e-2)
    np.testing.assert_allclose(np.asarray(dec), dec_ref, rtol=5e-2, atol=5e-2)

    print("KERNEL_OK")
</pallas_src>

<mosaic_0001>
module attributes {stable_mosaic.version = 11 : i64} {
  func.func @_samaf_kernel(%arg0: i32, %arg1: memref<8x16x128xf32, #tpu.memory_space<vmem>>, %arg2: memref<32x128xf32, #tpu.memory_space<vmem>>, %arg3: memref<32x128xf32, #tpu.memory_space<vmem>>, %arg4: memref<1x128xf32, #tpu.memory_space<vmem>>, %arg5: memref<32x128xf32, #tpu.memory_space<vmem>>, %arg6: memref<1x128xf32, #tpu.memory_space<vmem>>, %arg7: memref<16x32xf32, #tpu.memory_space<vmem>>, %arg8: memref<8x16x128xf32, #tpu.memory_space<vmem>>, %arg9: memref<128x32xf32, #tpu.memory_space<vmem>>) attributes {dimension_semantics = [#tpu.dimension_semantics<parallel>], iteration_bounds = array<i64: 1>, scalar_prefetch = 0 : i64, scratch_operands = 1 : i64, tpu.core_type = #tpu.core_type<tc>, window_params = [{transform_indices = @transform_0, window_bounds = array<i64: 8, 16, 128>}, {pipeline_mode = #tpu.pipeline_mode<synchronous>, transform_indices = @transform_1, window_bounds = array<i64: 32, 128>}, {pipeline_mode = #tpu.pipeline_mode<synchronous>, transform_indices = @transform_2, window_bounds = array<i64: 32, 128>}, {pipeline_mode = #tpu.pipeline_mode<synchronous>, transform_indices = @transform_3, window_bounds = array<i64: 1, 128>}, {pipeline_mode = #tpu.pipeline_mode<synchronous>, transform_indices = @transform_4, window_bounds = array<i64: 32, 128>}, {pipeline_mode = #tpu.pipeline_mode<synchronous>, transform_indices = @transform_5, window_bounds = array<i64: 1, 128>}, {transform_indices = @transform_6, window_bounds = array<i64: 16, 32>}, {transform_indices = @transform_7, window_bounds = array<i64: 8, 16, 128>}]} {
    %c0 = arith.constant 0 : index
    %c0_0 = arith.constant 0 : index
    %0 = vector.load %arg2[%c0, %c0_0] : memref<32x128xf32, #tpu.memory_space<vmem>>, vector<32x128xf32>
    %1 = arith.truncf %0 : vector<32x128xf32> to vector<32x128xbf16>
    %c0_1 = arith.constant 0 : index
    %c0_2 = arith.constant 0 : index
    %2 = vector.load %arg3[%c0_1, %c0_2] : memref<32x128xf32, #tpu.memory_space<vmem>>, vector<32x128xf32>
    %3 = arith.truncf %2 : vector<32x128xf32> to vector<32x128xbf16>
    %c0_3 = arith.constant 0 : index
    %c0_4 = arith.constant 0 : index
    %4 = vector.load %arg4[%c0_3, %c0_4] : memref<1x128xf32, #tpu.memory_space<vmem>>, vector<1x128xf32>
    %cst = arith.constant 0.000000e+00 : f32
    %5 = vector.broadcast %cst : f32 to vector<16x32xf32>
    %cst_5 = arith.constant 0.000000e+00 : f32
    %6 = vector.broadcast %cst_5 : f32 to vector<16x32xf32>
    %c0_6 = arith.constant 0 : index
    %c0_7 = arith.constant 0 : index
    %c0_8 = arith.constant 0 : index
    %7 = vector.load %arg1[%c0_6, %c0_7, %c0_8] : memref<8x16x128xf32, #tpu.memory_space<vmem>>, vector<1x16x128xf32>
    %8 = vector.shape_cast %7 : vector<1x16x128xf32> to vector<16x128xf32>
    %9 = arith.truncf %5 : vector<16x32xf32> to vector<16x32xbf16>
    %cst_9 = arith.constant dense<0.000000e+00> : vector<16x128xf32>
    %10 = tpu.matmul %9, %1, %cst_9 {dimension_numbers = #tpu.dot_dimension_numbers<[1], [0], [0], [1], [0, 0, 1, 1], [], []>} : vector<16x32xbf16>, vector<32x128xbf16>, vector<16x128xf32> -> vector<16x128xf32>
    %11 = arith.addf %8, %10 : vector<16x128xf32>
    %12 = vector.extract_strided_slice %11 {offsets = [0, 0], sizes = [16, 64], strides = [1, 1]} : vector<16x128xf32> to vector<16x64xf32>
    %13 = arith.negf %12 : vector<16x64xf32>
    %14 = math.exp %13 : vector<16x64xf32>
    %cst_10 = arith.constant 1.000000e+00 : f32
    %15 = vector.broadcast %cst_10 : f32 to vector<16x64xf32>
    %16 = arith.addf %15, %14 : vector<16x64xf32>
    %17 = arith.divf %15, %16 : vector<16x64xf32>
    %18 = vector.extract_strided_slice %11 {offsets = [0, 64], sizes = [16, 32], strides = [1, 1]} : vector<16x128xf32> to vector<16x32xf32>
    %19 = math.tanh %18 : vector<16x32xf32>
    %20 = vector.extract_strided_slice %11 {offsets = [0, 96], sizes = [16, 32], strides = [1, 1]} : vector<16x128xf32> to vector<16x32xf32>
    %21 = arith.negf %20 : vector<16x32xf32>
    %22 = math.exp %21 : vector<16x32xf32>
    %cst_11 = arith.constant 1.000000e+00 : f32
    %23 = vector.broadcast %cst_11 : f32 to vector<16x32xf32>
    %24 = arith.addf %23, %22 : vector<16x32xf32>
    %25 = arith.divf %23, %24 : vector<16x32xf32>
    %26 = vector.extract_strided_slice %17 {offsets = [0, 32], sizes = [16, 32], strides = [1, 1]} : vector<16x64xf32> to vector<16x32xf32>
    %27 = arith.mulf %26, %6 : vector<16x32xf32>
    %28 = vector.extract_strided_slice %17 {offsets = [0, 0], sizes = [16, 32], strides = [1, 1]} : vector<16x64xf32> to vector<16x32xf32>
    %29 = arith.mulf %28, %19 : vector<16x32xf32>
    %30 = arith.addf %27, %29 : vector<16x32xf32>
    %31 = math.tanh %30 : vector<16x32xf32>
    %32 = arith.mulf %25, %31 : vector<16x32xf32>
    %c1 = arith.constant 1 : index
    %c0_12 = arith.constant 0 : index
    %c0_13 = arith.constant 0 : index
    %33 = vector.load %arg1[%c1, %c0_12, %c0_13] : memref<8x16x128xf32, #tpu.memory_space<vmem>>, vector<1x16x128xf32>
    %34 = vector.shape_cast %33 : vector<1x16x128xf32> to vector<16x128xf32>
    %35 = arith.truncf %32 : vector<16x32xf32> to vector<16x32xbf16>
    %cst_14 = arith.constant dense<0.000000e+00> : vector<16x128xf32>
    %36 = tpu.matmul %35, %1, %cst_14 {dimension_numbers = #tpu.dot_dimension_numbers<[1], [0], [0], [1], [0, 0, 1, 1], [], []>} : vector<16x32xbf16>, vector<32x128xbf16>, vector<16x128xf32> -> vector<16x128xf32>
    %37 = arith.addf %34, %36 : vector<16x128xf32>
    %38 = vector.extract_strided_slice %37 {offsets = [0, 0], sizes = [16, 64], strides = [1, 1]} : vector<16x128xf32> to vector<16x64xf32>
    %39 = arith.negf %38 : vector<16x64xf32>
    %40 = math.exp %39 : vector<16x64xf32>
    %cst_15 = arith.constant 1.000000e+00 : f32
    %41 = vector.broadcast %cst_15 : f32 to vector<16x64xf32>
    %42 = arith.addf %41, %40 : vector<16x64xf32>
    %43 = arith.divf %41, %42 : vector<16x64xf32>
    %44 = vector.extract_strided_slice %37 {offsets = [0, 64], sizes = [16, 32], strides = [1, 1]} : vector<16x128xf32> to vector<16x32xf32>
    %45 = math.tanh %44 : vector<16x32xf32>
    %46 = vector.extract_strided_slice %37 {offsets = [0, 96], sizes = [16, 32], strides = [1, 1]} : vector<16x128xf32> to vector<16x32xf32>
    %47 = arith.negf %46 : vector<16x32xf32>
    %48 = math.exp %47 : vector<16x32xf32>
    %cst_16 = arith.constant 1.000000e+00 : f32
    %49 = vector.broadcast %cst_16 : f32 to vector<16x32xf32>
    %50 = arith.addf %49, %48 : vector<16x32xf32>
    %51 = arith.divf %49, %50 : vector<16x32xf32>
    %52 = vector.extract_strided_slice %43 {offsets = [0, 32], sizes = [16, 32], strides = [1, 1]} : vector<16x64xf32> to vector<16x32xf32>
    %53 = arith.mulf %52, %30 : vector<16x32xf32>
    %54 = vector.extract_strided_slice %43 {offsets = [0, 0], sizes = [16, 32], strides = [1, 1]} : vector<16x64xf32> to vector<16x32xf32>
    %55 = arith.mulf %54, %45 : vector<16x32xf32>
    %56 = arith.addf %53, %55 : vector<16x32xf32>
    %57 = math.tanh %56 : vector<16x32xf32>
    %58 = arith.mulf %51, %57 : vector<16x32xf32>
    %c2 = arith.constant 2 : index
    %c0_17 = arith.constant 0 : index
    %c0_18 = arith.constant 0 : index
    %59 = vector.load %arg1[%c2, %c0_17, %c0_18] : memref<8x16x128xf32, #tpu.memory_space<vmem>>, vector<1x16x128xf32>
    %60 = vector.shape_cast %59 : vector<1x16x128xf32> to vector<16x128xf32>
    %61 = arith.truncf %58 : vector<16x32xf32> to vector<16x32xbf16>
    %cst_19 = arith.constant dense<0.000000e+00> : vector<16x128xf32>
    %62 = tpu.matmul %61, %1, %cst_19 {dimension_numbers = #tpu.dot_dimension_numbers<[1], [0], [0], [1], [0, 0, 1, 1], [], []>} : vector<16x32xbf16>, vector<32x128xbf16>, vector<16x128xf32> -> vector<16x128xf32>
    %63 = arith.addf %60, %62 : vector<16x128xf32>
    %64 = vector.extract_strided_slice %63 {offsets = [0, 0], sizes = [16, 64], strides = [1, 1]} : vector<16x128xf32> to vector<16x64xf32>
    %65 = arith.negf %64 : vector<16x64xf32>
    %66 = math.exp %65 : vector<16x64xf32>
    %cst_20 = arith.constant 1.000000e+00 : f32
    %67 = vector.broadcast %cst_20 : f32 to vector<16x64xf32>
    %68 = arith.addf %67, %66 : vector<16x64xf32>
    %69 = arith.divf %67, %68 : vector<16x64xf32>
    %70 = vector.extract_strided_slice %63 {offsets = [0, 64], sizes = [16, 32], strides = [1, 1]} : vector<16x128xf32> to vector<16x32xf32>
    %71 = math.tanh %70 : vector<16x32xf32>
    %72 = vector.extract_strided_slice %63 {offsets = [0, 96], sizes = [16, 32], strides = [1, 1]} : vector<16x128xf32> to vector<16x32xf32>
    %73 = arith.negf %72 : vector<16x32xf32>
    %74 = math.exp %73 : vector<16x32xf32>
    %cst_21 = arith.constant 1.000000e+00 : f32
    %75 = vector.broadcast %cst_21 : f32 to vector<16x32xf32>
    %76 = arith.addf %75, %74 : vector<16x32xf32>
    %77 = arith.divf %75, %76 : vector<16x32xf32>
    %78 = vector.extract_strided_slice %69 {offsets = [0, 32], sizes = [16, 32], strides = [1, 1]} : vector<16x64xf32> to vector<16x32xf32>
    %79 = arith.mulf %78, %56 : vector<16x32xf32>
    %80 = vector.extract_strided_slice %69 {offsets = [0, 0], sizes = [16, 32], strides = [1, 1]} : vector<16x64xf32> to vector<16x32xf32>
    %81 = arith.mulf %80, %71 : vector<16x32xf32>
    %82 = arith.addf %79, %81 : vector<16x32xf32>
    %83 = math.tanh %82 : vector<16x32xf32>
    %84 = arith.mulf %77, %83 : vector<16x32xf32>
    %c3 = arith.constant 3 : index
    %c0_22 = arith.constant 0 : index
    %c0_23 = arith.constant 0 : index
    %85 = vector.load %arg1[%c3, %c0_22, %c0_23] : memref<8x16x128xf32, #tpu.memory_space<vmem>>, vector<1x16x128xf32>
    %86 = vector.shape_cast %85 : vector<1x16x128xf32> to vector<16x128xf32>
    %87 = arith.truncf %84 : vector<16x32xf32> to vector<16x32xbf16>
    %cst_24 = arith.constant dense<0.000000e+00> : vector<16x128xf32>
    %88 = tpu.matmul %87, %1, %cst_24 {dimension_numbers = #tpu.dot_dimension_numbers<[1], [0], [0], [1], [0, 0, 1, 1], [], []>} : vector<16x32xbf16>, vector<32x128xbf16>, vector<16x128xf32> -> vector<16x128xf32>
    %89 = arith.addf %86, %88 : vector<16x128xf32>
    %90 = vector.extract_strided_slice %89 {offsets = [0, 0], sizes = [16, 64], strides = [1, 1]} : vector<16x128xf32> to vector<16x64xf32>
    %91 = arith.negf %90 : vector<16x64xf32>
    %92 = math.exp %91 : vector<16x64xf32>
    %cst_25 = arith.constant 1.000000e+00 : f32
    %93 = vector.broadcast %cst_25 : f32 to vector<16x64xf32>
    %94 = arith.addf %93, %92 : vector<16x64xf32>
    %95 = arith.divf %93, %94 : vector<16x64xf32>
    %96 = vector.extract_strided_slice %89 {offsets = [0, 64], sizes = [16, 32], strides = [1, 1]} : vector<16x128xf32> to vector<16x32xf32>
    %97 = math.tanh %96 : vector<16x32xf32>
    %98 = vector.extract_strided_slice %89 {offsets = [0, 96], sizes = [16, 32], strides = [1, 1]} : vector<16x128xf32> to vector<16x32xf32>
    %99 = arith.negf %98 : vector<16x32xf32>
    %100 = math.exp %99 : vector<16x32xf32>
    %cst_26 = arith.constant 1.000000e+00 : f32
    %101 = vector.broadcast %cst_26 : f32 to vector<16x32xf32>
    %102 = arith.addf %101, %100 : vector<16x32xf32>
    %103 = arith.divf %101, %102 : vector<16x32xf32>
    %104 = vector.extract_strided_slice %95 {offsets = [0, 32], sizes = [16, 32], strides = [1, 1]} : vector<16x64xf32> to vector<16x32xf32>
    %105 = arith.mulf %104, %82 : vector<16x32xf32>
    %106 = vector.extract_strided_slice %95 {offsets = [0, 0], sizes = [16, 32], strides = [1, 1]} : vector<16x64xf32> to vector<16x32xf32>
    %107 = arith.mulf %106, %97 : vector<16x32xf32>
    %108 = arith.addf %105, %107 : vector<16x32xf32>
    %109 = math.tanh %108 : vector<16x32xf32>
    %110 = arith.mulf %103, %109 : vector<16x32xf32>
    %c4 = arith.constant 4 : index
    %c0_27 = arith.constant 0 : index
    %c0_28 = arith.constant 0 : index
    %111 = vector.load %arg1[%c4, %c0_27, %c0_28] : memref<8x16x128xf32, #tpu.memory_space<vmem>>, vector<1x16x128xf32>
    %112 = vector.shape_cast %111 : vector<1x16x128xf32> to vector<16x128xf32>
    %113 = arith.truncf %110 : vector<16x32xf32> to vector<16x32xbf16>
    %cst_29 = arith.constant dense<0.000000e+00> : vector<16x128xf32>
    %114 = tpu.matmul %113, %1, %cst_29 {dimension_numbers = #tpu.dot_dimension_numbers<[1], [0], [0], [1], [0, 0, 1, 1], [], []>} : vector<16x32xbf16>, vector<32x128xbf16>, vector<16x128xf32> -> vector<16x128xf32>
    %115 = arith.addf %112, %114 : vector<16x128xf32>
    %116 = vector.extract_strided_slice %115 {offsets = [0, 0], sizes = [16, 64], strides = [1, 1]} : vector<16x128xf32> to vector<16x64xf32>
    %117 = arith.negf %116 : vector<16x64xf32>
    %118 = math.exp %117 : vector<16x64xf32>
    %cst_30 = arith.constant 1.000000e+00 : f32
    %119 = vector.broadcast %cst_30 : f32 to vector<16x64xf32>
    %120 = arith.addf %119, %118 : vector<16x64xf32>
    %121 = arith.divf %119, %120 : vector<16x64xf32>
    %122 = vector.extract_strided_slice %115 {offsets = [0, 64], sizes = [16, 32], strides = [1, 1]} : vector<16x128xf32> to vector<16x32xf32>
    %123 = math.tanh %122 : vector<16x32xf32>
    %124 = vector.extract_strided_slice %115 {offsets = [0, 96], sizes = [16, 32], strides = [1, 1]} : vector<16x128xf32> to vector<16x32xf32>
    %125 = arith.negf %124 : vector<16x32xf32>
    %126 = math.exp %125 : vector<16x32xf32>
    %cst_31 = arith.constant 1.000000e+00 : f32
    %127 = vector.broadcast %cst_31 : f32 to vector<16x32xf32>
    %128 = arith.addf %127, %126 : vector<16x32xf32>
    %129 = arith.divf %127, %128 : vector<16x32xf32>
    %130 = vector.extract_strided_slice %121 {offsets = [0, 32], sizes = [16, 32], strides = [1, 1]} : vector<16x64xf32> to vector<16x32xf32>
    %131 = arith.mulf %130, %108 : vector<16x32xf32>
    %132 = vector.extract_strided_slice %121 {offsets = [0, 0], sizes = [16, 32], strides = [1, 1]} : vector<16x64xf32> to vector<16x32xf32>
    %133 = arith.mulf %132, %123 : vector<16x32xf32>
    %134 = arith.addf %131, %133 : vector<16x32xf32>
    %135 = math.tanh %134 : vector<16x32xf32>
    %136 = arith.mulf %129, %135 : vector<16x32xf32>
    %c5 = arith.constant 5 : index
    %c0_32 = arith.constant 0 : index
    %c0_33 = arith.constant 0 : index
    %137 = vector.load %arg1[%c5, %c0_32, %c0_33] : memref<8x16x128xf32, #tpu.memory_space<vmem>>, vector<1x16x128xf32>
    %138 = vector.shape_cast %137 : vector<1x16x128xf32> to vector<16x128xf32>
    %139 = arith.truncf %136 : vector<16x32xf32> to vector<16x32xbf16>
    %cst_34 = arith.constant dense<0.000000e+00> : vector<16x128xf32>
    %140 = tpu.matmul %139, %1, %cst_34 {dimension_numbers = #tpu.dot_dimension_numbers<[1], [0], [0], [1], [0, 0, 1, 1], [], []>} : vector<16x32xbf16>, vector<32x128xbf16>, vector<16x128xf32> -> vector<16x128xf32>
    %141 = arith.addf %138, %140 : vector<16x128xf32>
    %142 = vector.extract_strided_slice %141 {offsets = [0, 0], sizes = [16, 64], strides = [1, 1]} : vector<16x128xf32> to vector<16x64xf32>
    %143 = arith.negf %142 : vector<16x64xf32>
    %144 = math.exp %143 : vector<16x64xf32>
    %cst_35 = arith.constant 1.000000e+00 : f32
    %145 = vector.broadcast %cst_35 : f32 to vector<16x64xf32>
    %146 = arith.addf %145, %144 : vector<16x64xf32>
    %147 = arith.divf %145, %146 : vector<16x64xf32>
    %148 = vector.extract_strided_slice %141 {offsets = [0, 64], sizes = [16, 32], strides = [1, 1]} : vector<16x128xf32> to vector<16x32xf32>
    %149 = math.tanh %148 : vector<16x32xf32>
    %150 = vector.extract_strided_slice %141 {offsets = [0, 96], sizes = [16, 32], strides = [1, 1]} : vector<16x128xf32> to vector<16x32xf32>
    %151 = arith.negf %150 : vector<16x32xf32>
    %152 = math.exp %151 : vector<16x32xf32>
    %cst_36 = arith.constant 1.000000e+00 : f32
    %153 = vector.broadcast %cst_36 : f32 to vector<16x32xf32>
    %154 = arith.addf %153, %152 : vector<16x32xf32>
    %155 = arith.divf %153, %154 : vector<16x32xf32>
    %156 = vector.extract_strided_slice %147 {offsets = [0, 32], sizes = [16, 32], strides = [1, 1]} : vector<16x64xf32> to vector<16x32xf32>
    %157 = arith.mulf %156, %134 : vector<16x32xf32>
    %158 = vector.extract_strided_slice %147 {offsets = [0, 0], sizes = [16, 32], strides = [1, 1]} : vector<16x64xf32> to vector<16x32xf32>
    %159 = arith.mulf %158, %149 : vector<16x32xf32>
    %160 = arith.addf %157, %159 : vector<16x32xf32>
    %161 = math.tanh %160 : vector<16x32xf32>
    %162 = arith.mulf %155, %161 : vector<16x32xf32>
    %c6 = arith.constant 6 : index
    %c0_37 = arith.constant 0 : index
    %c0_38 = arith.constant 0 : index
    %163 = vector.load %arg1[%c6, %c0_37, %c0_38] : memref<8x16x128xf32, #tpu.memory_space<vmem>>, vector<1x16x128xf32>
    %164 = vector.shape_cast %163 : vector<1x16x128xf32> to vector<16x128xf32>
    %165 = arith.truncf %162 : vector<16x32xf32> to vector<16x32xbf16>
    %cst_39 = arith.constant dense<0.000000e+00> : vector<16x128xf32>
    %166 = tpu.matmul %165, %1, %cst_39 {dimension_numbers = #tpu.dot_dimension_numbers<[1], [0], [0], [1], [0, 0, 1, 1], [], []>} : vector<16x32xbf16>, vector<32x128xbf16>, vector<16x128xf32> -> vector<16x128xf32>
    %167 = arith.addf %164, %166 : vector<16x128xf32>
    %168 = vector.extract_strided_slice %167 {offsets = [0, 0], sizes = [16, 64], strides = [1, 1]} : vector<16x128xf32> to vector<16x64xf32>
    %169 = arith.negf %168 : vector<16x64xf32>
    %170 = math.exp %169 : vector<16x64xf32>
    %cst_40 = arith.constant 1.000000e+00 : f32
    %171 = vector.broadcast %cst_40 : f32 to vector<16x64xf32>
    %172 = arith.addf %171, %170 : vector<16x64xf32>
    %173 = arith.divf %171, %172 : vector<16x64xf32>
    %174 = vector.extract_strided_slice %167 {offsets = [0, 64], sizes = [16, 32], strides = [1, 1]} : vector<16x128xf32> to vector<16x32xf32>
    %175 = math.tanh %174 : vector<16x32xf32>
    %176 = vector.extract_strided_slice %167 {offsets = [0, 96], sizes = [16, 32], strides = [1, 1]} : vector<16x128xf32> to vector<16x32xf32>
    %177 = arith.negf %176 : vector<16x32xf32>
    %178 = math.exp %177 : vector<16x32xf32>
    %cst_41 = arith.constant 1.000000e+00 : f32
    %179 = vector.broadcast %cst_41 : f32 to vector<16x32xf32>
    %180 = arith.addf %179, %178 : vector<16x32xf32>
    %181 = arith.divf %179, %180 : vector<16x32xf32>
    %182 = vector.extract_strided_slice %173 {offsets = [0, 32], sizes = [16, 32], strides = [1, 1]} : vector<16x64xf32> to vector<16x32xf32>
    %183 = arith.mulf %182, %160 : vector<16x32xf32>
    %184 = vector.extract_strided_slice %173 {offsets = [0, 0], sizes = [16, 32], strides = [1, 1]} : vector<16x64xf32> to vector<16x32xf32>
    %185 = arith.mulf %184, %175 : vector<16x32xf32>
    %186 = arith.addf %183, %185 : vector<16x32xf32>
    %187 = math.tanh %186 : vector<16x32xf32>
    %188 = arith.mulf %181, %187 : vector<16x32xf32>
    %c7 = arith.constant 7 : index
    %c0_42 = arith.constant 0 : index
    %c0_43 = arith.constant 0 : index
    %189 = vector.load %arg1[%c7, %c0_42, %c0_43] : memref<8x16x128xf32, #tpu.memory_space<vmem>>, vector<1x16x128xf32>
    %190 = vector.shape_cast %189 : vector<1x16x128xf32> to vector<16x128xf32>
    %191 = arith.truncf %188 : vector<16x32xf32> to vector<16x32xbf16>
    %cst_44 = arith.constant dense<0.000000e+00> : vector<16x128xf32>
    %192 = tpu.matmul %191, %1, %cst_44 {dimension_numbers = #tpu.dot_dimension_numbers<[1], [0], [0], [1], [0, 0, 1, 1], [], []>} : vector<16x32xbf16>, vector<32x128xbf16>, vector<16x128xf32> -> vector<16x128xf32>
    %193 = arith.addf %190, %192 : vector<16x128xf32>
    %194 = vector.extract_strided_slice %193 {offsets = [0, 0], sizes = [16, 64], strides = [1, 1]} : vector<16x128xf32> to vector<16x64xf32>
    %195 = arith.negf %194 : vector<16x64xf32>
    %196 = math.exp %195 : vector<16x64xf32>
    %cst_45 = arith.constant 1.000000e+00 : f32
    %197 = vector.broadcast %cst_45 : f32 to vector<16x64xf32>
    %198 = arith.addf %197, %196 : vector<16x64xf32>
    %199 = arith.divf %197, %198 : vector<16x64xf32>
    %200 = vector.extract_strided_slice %193 {offsets = [0, 64], sizes = [16, 32], strides = [1, 1]} : vector<16x128xf32> to vector<16x32xf32>
    %201 = math.tanh %200 : vector<16x32xf32>
    %202 = vector.extract_strided_slice %193 {offsets = [0, 96], sizes = [16, 32], strides = [1, 1]} : vector<16x128xf32> to vector<16x32xf32>
    %203 = arith.negf %202 : vector<16x32xf32>
    %204 = math.exp %203 : vector<16x32xf32>
    %cst_46 = arith.constant 1.000000e+00 : f32
    %205 = vector.broadcast %cst_46 : f32 to vector<16x32xf32>
    %206 = arith.addf %205, %204 : vector<16x32xf32>
    %207 = arith.divf %205, %206 : vector<16x32xf32>
    %208 = vector.extract_strided_slice %199 {offsets = [0, 32], sizes = [16, 32], strides = [1, 1]} : vector<16x64xf32> to vector<16x32xf32>
    %209 = arith.mulf %208, %186 : vector<16x32xf32>
    %210 = vector.extract_strided_slice %199 {offsets = [0, 0], sizes = [16, 32], strides = [1, 1]} : vector<16x64xf32> to vector<16x32xf32>
    %211 = arith.mulf %210, %201 : vector<16x32xf32>
    %212 = arith.addf %209, %211 : vector<16x32xf32>
    %213 = math.tanh %212 : vector<16x32xf32>
    %214 = arith.mulf %207, %213 : vector<16x32xf32>
    %c0_47 = arith.constant 0 : index
    %c0_48 = arith.constant 0 : index
    %215 = vector.load %arg7[%c0_47, %c0_48] : memref<16x32xf32, #tpu.memory_space<vmem>>, vector<16x32xf32>
    tpu.vector_store %arg7[%c0_47, %c0_48], %214 {strides = array<i32>} : memref<16x32xf32, #tpu.memory_space<vmem>>, vector<16x32xf32>,
    %c7_49 = arith.constant 7 : index
    %c0_50 = arith.constant 0 : index
    %c0_51 = arith.constant 0 : index
    %216 = vector.load %arg1[%c7_49, %c0_50, %c0_51] : memref<8x16x128xf32, #tpu.memory_space<vmem>>, vector<1x16x128xf32>
    %217 = vector.shape_cast %216 : vector<1x16x128xf32> to vector<16x128xf32>
    %218 = arith.truncf %214 : vector<16x32xf32> to vector<16x32xbf16>
    %cst_52 = arith.constant dense<0.000000e+00> : vector<16x128xf32>
    %219 = tpu.matmul %218, %1, %cst_52 {dimension_numbers = #tpu.dot_dimension_numbers<[1], [0], [0], [1], [0, 0, 1, 1], [], []>} : vector<16x32xbf16>, vector<32x128xbf16>, vector<16x128xf32> -> vector<16x128xf32>
    %220 = arith.addf %217, %219 : vector<16x128xf32>
    %221 = vector.extract_strided_slice %220 {offsets = [0, 0], sizes = [16, 64], strides = [1, 1]} : vector<16x128xf32> to vector<16x64xf32>
    %222 = arith.negf %221 : vector<16x64xf32>
    %223 = math.exp %222 : vector<16x64xf32>
    %cst_53 = arith.constant 1.000000e+00 : f32
    %224 = vector.broadcast %cst_53 : f32 to vector<16x64xf32>
    %225 = arith.addf %224, %223 : vector<16x64xf32>
    %226 = arith.divf %224, %225 : vector<16x64xf32>
    %227 = vector.extract_strided_slice %220 {offsets = [0, 64], sizes = [16, 32], strides = [1, 1]} : vector<16x128xf32> to vector<16x32xf32>
    %228 = math.tanh %227 : vector<16x32xf32>
    %229 = vector.extract_strided_slice %220 {offsets = [0, 96], sizes = [16, 32], strides = [1, 1]} : vector<16x128xf32> to vector<16x32xf32>
    %230 = arith.negf %229 : vector<16x32xf32>
    %231 = math.exp %230 : vector<16x32xf32>
    %cst_54 = arith.constant 1.000000e+00 : f32
    %232 = vector.broadcast %cst_54 : f32 to vector<16x32xf32>
    %233 = arith.addf %232, %231 : vector<16x32xf32>
    %234 = arith.divf %232, %233 : vector<16x32xf32>
    %235 = vector.extract_strided_slice %226 {offsets = [0, 32], sizes = [16, 32], strides = [1, 1]} : vector<16x64xf32> to vector<16x32xf32>
    %236 = arith.mulf %235, %212 : vector<16x32xf32>
    %237 = vector.extract_strided_slice %226 {offsets = [0, 0], sizes = [16, 32], strides = [1, 1]} : vector<16x64xf32> to vector<16x32xf32>
    %238 = arith.mulf %237, %228 : vector<16x32xf32>
    %239 = arith.addf %236, %238 : vector<16x32xf32>
    %240 = math.tanh %239 : vector<16x32xf32>
    %241 = arith.mulf %234, %240 : vector<16x32xf32>
    %c0_55 = arith.constant 0 : index
    %c0_56 = arith.constant 0 : index
    %242 = vector.load %arg9[%c0_55, %c0_56] : memref<128x32xf32, #tpu.memory_space<vmem>>, vector<16x32xf32>
    tpu.vector_store %arg9[%c0_55, %c0_56], %241 {strides = array<i32>} : memref<128x32xf32, #tpu.memory_space<vmem>>, vector<16x32xf32>,
    %243 = arith.truncf %241 : vector<16x32xf32> to vector<16x32xbf16>
    %cst_57 = arith.constant dense<0.000000e+00> : vector<16x128xf32>
    %244 = tpu.matmul %243, %3, %cst_57 {dimension_numbers = #tpu.dot_dimension_numbers<[1], [0], [0], [1], [0, 0, 1, 1], [], []>} : vector<16x32xbf16>, vector<32x128xbf16>, vector<16x128xf32> -> vector<16x128xf32>
    %245 = vector.broadcast %4 : vector<1x128xf32> to vector<16x128xf32>
    %246 = arith.addf %245, %244 : vector<16x128xf32>
    %247 = vector.extract_strided_slice %246 {offsets = [0, 0], sizes = [16, 64], strides = [1, 1]} : vector<16x128xf32> to vector<16x64xf32>
    %248 = arith.negf %247 : vector<16x64xf32>
    %249 = math.exp %248 : vector<16x64xf32>
    %cst_58 = arith.constant 1.000000e+00 : f32
    %250 = vector.broadcast %cst_58 : f32 to vector<16x64xf32>
    %251 = arith.addf %250, %249 : vector<16x64xf32>
    %252 = arith.divf %250, %251 : vector<16x64xf32>
    %253 = vector.extract_strided_slice %246 {offsets = [0, 64], sizes = [16, 32], strides = [1, 1]} : vector<16x128xf32> to vector<16x32xf32>
    %254 = math.tanh %253 : vector<16x32xf32>
    %255 = vector.extract_strided_slice %246 {offsets = [0, 96], sizes = [16, 32], strides = [1, 1]} : vector<16x128xf32> to vector<16x32xf32>
    %256 = arith.negf %255 : vector<16x32xf32>
    %257 = math.exp %256 : vector<16x32xf32>
    %cst_59 = arith.constant 1.000000e+00 : f32
    %258 = vector.broadcast %cst_59 : f32 to vector<16x32xf32>
    %259 = arith.addf %258, %257 : vector<16x32xf32>
    %260 = arith.divf %258, %259 : vector<16x32xf32>
    %261 = vector.extract_strided_slice %252 {offsets = [0, 32], sizes = [16, 32], strides = [1, 1]} : vector<16x64xf32> to vector<16x32xf32>
    %262 = arith.mulf %261, %239 : vector<16x32xf32>
    %263 = vector.extract_strided_slice %252 {offsets = [0, 0], sizes = [16, 32], strides = [1, 1]} : vector<16x64xf32> to vector<16x32xf32>
    %264 = arith.mulf %263, %254 : vector<16x32xf32>
    %265 = arith.addf %262, %264 : vector<16x32xf32>
    %266 = math.tanh %265 : vector<16x32xf32>
    %267 = arith.mulf %260, %266 : vector<16x32xf32>
    %c16 = arith.constant 16 : index
    %c0_60 = arith.constant 0 : index
    %268 = vector.load %arg9[%c16, %c0_60] : memref<128x32xf32, #tpu.memory_space<vmem>>, vector<16x32xf32>
    tpu.vector_store %arg9[%c16, %c0_60], %267 {strides = array<i32>} : memref<128x32xf32, #tpu.memory_space<vmem>>, vector<16x32xf32>,
    %269 = arith.truncf %267 : vector<16x32xf32> to vector<16x32xbf16>
    %cst_61 = arith.constant dense<0.000000e+00> : vector<16x128xf32>
    %270 = tpu.matmul %269, %3, %cst_61 {dimension_numbers = #tpu.dot_dimension_numbers<[1], [0], [0], [1], [0, 0, 1, 1], [], []>} : vector<16x32xbf16>, vector<32x128xbf16>, vector<16x128xf32> -> vector<16x128xf32>
    %271 = vector.broadcast %4 : vector<1x128xf32> to vector<16x128xf32>
    %272 = arith.addf %271, %270 : vector<16x128xf32>
    %273 = vector.extract_strided_slice %272 {offsets = [0, 0], sizes = [16, 64], strides = [1, 1]} : vector<16x128xf32> to vector<16x64xf32>
    %274 = arith.negf %273 : vector<16x64xf32>
    %275 = math.exp %274 : vector<16x64xf32>
    %cst_62 = arith.constant 1.000000e+00 : f32
    %276 = vector.broadcast %cst_62 : f32 to vector<16x64xf32>
    %277 = arith.addf %276, %275 : vector<16x64xf32>
    %278 = arith.divf %276, %277 : vector<16x64xf32>
    %279 = vector.extract_strided_slice %272 {offsets = [0, 64], sizes = [16, 32], strides = [1, 1]} : vector<16x128xf32> to vector<16x32xf32>
    %280 = math.tanh %279 : vector<16x32xf32>
    %281 = vector.extract_strided_slice %272 {offsets = [0, 96], sizes = [16, 32], strides = [1, 1]} : vector<16x128xf32> to vector<16x32xf32>
    %282 = arith.negf %281 : vector<16x32xf32>
    %283 = math.exp %282 : vector<16x32xf32>
    %cst_63 = arith.constant 1.000000e+00 : f32
    %284 = vector.broadcast %cst_63 : f32 to vector<16x32xf32>
    %285 = arith.addf %284, %283 : vector<16x32xf32>
    %286 = arith.divf %284, %285 : vector<16x32xf32>
    %287 = vector.extract_strided_slice %278 {offsets = [0, 32], sizes = [16, 32], strides = [1, 1]} : vector<16x64xf32> to vector<16x32xf32>
    %288 = arith.mulf %287, %265 : vector<16x32xf32>
    %289 = vector.extract_strided_slice %278 {offsets = [0, 0], sizes = [16, 32], strides = [1, 1]} : vector<16x64xf32> to vector<16x32xf32>
    %290 = arith.mulf %289, %280 : vector<16x32xf32>
    %291 = arith.addf %288, %290 : vector<16x32xf32>
    %292 = math.tanh %291 : vector<16x32xf32>
    %293 = arith.mulf %286, %292 : vector<16x32xf32>
    %c32 = arith.constant 32 : index
    %c0_64 = arith.constant 0 : index
    %294 = vector.load %arg9[%c32, %c0_64] : memref<128x32xf32, #tpu.memory_space<vmem>>, vector<16x32xf32>
    tpu.vector_store %arg9[%c32, %c0_64], %293 {strides = array<i32>} : memref<128x32xf32, #tpu.memory_space<vmem>>, vector<16x32xf32>,
    %295 = arith.truncf %293 : vector<16x32xf32> to vector<16x32xbf16>
    %cst_65 = arith.constant dense<0.000000e+00> : vector<16x128xf32>
    %296 = tpu.matmul %295, %3, %cst_65 {dimension_numbers = #tpu.dot_dimension_numbers<[1], [0], [0], [1], [0, 0, 1, 1], [], []>} : vector<16x32xbf16>, vector<32x128xbf16>, vector<16x128xf32> -> vector<16x128xf32>
    %297 = vector.broadcast %4 : vector<1x128xf32> to vector<16x128xf32>
    %298 = arith.addf %297, %296 : vector<16x128xf32>
    %299 = vector.extract_strided_slice %298 {offsets = [0, 0], sizes = [16, 64], strides = [1, 1]} : vector<16x128xf32> to vector<16x64xf32>
    %300 = arith.negf %299 : vector<16x64xf32>
    %301 = math.exp %300 : vector<16x64xf32>
    %cst_66 = arith.constant 1.000000e+00 : f32
    %302 = vector.broadcast %cst_66 : f32 to vector<16x64xf32>
    %303 = arith.addf %302, %301 : vector<16x64xf32>
    %304 = arith.divf %302, %303 : vector<16x64xf32>
    %305 = vector.extract_strided_slice %298 {offsets = [0, 64], sizes = [16, 32], strides = [1, 1]} : vector<16x128xf32> to vector<16x32xf32>
    %306 = math.tanh %305 : vector<16x32xf32>
    %307 = vector.extract_strided_slice %298 {offsets = [0, 96], sizes = [16, 32], strides = [1, 1]} : vector<16x128xf32> to vector<16x32xf32>
    %308 = arith.negf %307 : vector<16x32xf32>
    %309 = math.exp %308 : vector<16x32xf32>
    %cst_67 = arith.constant 1.000000e+00 : f32
    %310 = vector.broadcast %cst_67 : f32 to vector<16x32xf32>
    %311 = arith.addf %310, %309 : vector<16x32xf32>
    %312 = arith.divf %310, %311 : vector<16x32xf32>
    %313 = vector.extract_strided_slice %304 {offsets = [0, 32], sizes = [16, 32], strides = [1, 1]} : vector<16x64xf32> to vector<16x32xf32>
    %314 = arith.mulf %313, %291 : vector<16x32xf32>
    %315 = vector.extract_strided_slice %304 {offsets = [0, 0], sizes = [16, 32], strides = [1, 1]} : vector<16x64xf32> to vector<16x32xf32>
    %316 = arith.mulf %315, %306 : vector<16x32xf32>
    %317 = arith.addf %314, %316 : vector<16x32xf32>
    %318 = math.tanh %317 : vector<16x32xf32>
    %319 = arith.mulf %312, %318 : vector<16x32xf32>
    %c48 = arith.constant 48 : index
    %c0_68 = arith.constant 0 : index
    %320 = vector.load %arg9[%c48, %c0_68] : memref<128x32xf32, #tpu.memory_space<vmem>>, vector<16x32xf32>
    tpu.vector_store %arg9[%c48, %c0_68], %319 {strides = array<i32>} : memref<128x32xf32, #tpu.memory_space<vmem>>, vector<16x32xf32>,
    %321 = arith.truncf %319 : vector<16x32xf32> to vector<16x32xbf16>
    %cst_69 = arith.constant dense<0.000000e+00> : vector<16x128xf32>
    %322 = tpu.matmul %321, %3, %cst_69 {dimension_numbers = #tpu.dot_dimension_numbers<[1], [0], [0], [1], [0, 0, 1, 1], [], []>} : vector<16x32xbf16>, vector<32x128xbf16>, vector<16x128xf32> -> vector<16x128xf32>
    %323 = vector.broadcast %4 : vector<1x128xf32> to vector<16x128xf32>
    %324 = arith.addf %323, %322 : vector<16x128xf32>
    %325 = vector.extract_strided_slice %324 {offsets = [0, 0], sizes = [16, 64], strides = [1, 1]} : vector<16x128xf32> to vector<16x64xf32>
    %326 = arith.negf %325 : vector<16x64xf32>
    %327 = math.exp %326 : vector<16x64xf32>
    %cst_70 = arith.constant 1.000000e+00 : f32
    %328 = vector.broadcast %cst_70 : f32 to vector<16x64xf32>
    %329 = arith.addf %328, %327 : vector<16x64xf32>
    %330 = arith.divf %328, %329 : vector<16x64xf32>
    %331 = vector.extract_strided_slice %324 {offsets = [0, 64], sizes = [16, 32], strides = [1, 1]} : vector<16x128xf32> to vector<16x32xf32>
    %332 = math.tanh %331 : vector<16x32xf32>
    %333 = vector.extract_strided_slice %324 {offsets = [0, 96], sizes = [16, 32], strides = [1, 1]} : vector<16x128xf32> to vector<16x32xf32>
    %334 = arith.negf %333 : vector<16x32xf32>
    %335 = math.exp %334 : vector<16x32xf32>
    %cst_71 = arith.constant 1.000000e+00 : f32
    %336 = vector.broadcast %cst_71 : f32 to vector<16x32xf32>
    %337 = arith.addf %336, %335 : vector<16x32xf32>
    %338 = arith.divf %336, %337 : vector<16x32xf32>
    %339 = vector.extract_strided_slice %330 {offsets = [0, 32], sizes = [16, 32], strides = [1, 1]} : vector<16x64xf32> to vector<16x32xf32>
    %340 = arith.mulf %339, %317 : vector<16x32xf32>
    %341 = vector.extract_strided_slice %330 {offsets = [0, 0], sizes = [16, 32], strides = [1, 1]} : vector<16x64xf32> to vector<16x32xf32>
    %342 = arith.mulf %341, %332 : vector<16x32xf32>
    %343 = arith.addf %340, %342 : vector<16x32xf32>
    %344 = math.tanh %343 : vector<16x32xf32>
    %345 = arith.mulf %338, %344 : vector<16x32xf32>
    %c64 = arith.constant 64 : index
    %c0_72 = arith.constant 0 : index
    %346 = vector.load %arg9[%c64, %c0_72] : memref<128x32xf32, #tpu.memory_space<vmem>>, vector<16x32xf32>
    tpu.vector_store %arg9[%c64, %c0_72], %345 {strides = array<i32>} : memref<128x32xf32, #tpu.memory_space<vmem>>, vector<16x32xf32>,
    %347 = arith.truncf %345 : vector<16x32xf32> to vector<16x32xbf16>
    %cst_73 = arith.constant dense<0.000000e+00> : vector<16x128xf32>
    %348 = tpu.matmul %347, %3, %cst_73 {dimension_numbers = #tpu.dot_dimension_numbers<[1], [0], [0], [1], [0, 0, 1, 1], [], []>} : vector<16x32xbf16>, vector<32x128xbf16>, vector<16x128xf32> -> vector<16x128xf32>
    %349 = vector.broadcast %4 : vector<1x128xf32> to vector<16x128xf32>
    %350 = arith.addf %349, %348 : vector<16x128xf32>
    %351 = vector.extract_strided_slice %350 {offsets = [0, 0], sizes = [16, 64], strides = [1, 1]} : vector<16x128xf32> to vector<16x64xf32>
    %352 = arith.negf %351 : vector<16x64xf32>
    %353 = math.exp %352 : vector<16x64xf32>
    %cst_74 = arith.constant 1.000000e+00 : f32
    %354 = vector.broadcast %cst_74 : f32 to vector<16x64xf32>
    %355 = arith.addf %354, %353 : vector<16x64xf32>
    %356 = arith.divf %354, %355 : vector<16x64xf32>
    %357 = vector.extract_strided_slice %350 {offsets = [0, 64], sizes = [16, 32], strides = [1, 1]} : vector<16x128xf32> to vector<16x32xf32>
    %358 = math.tanh %357 : vector<16x32xf32>
    %359 = vector.extract_strided_slice %350 {offsets = [0, 96], sizes = [16, 32], strides = [1, 1]} : vector<16x128xf32> to vector<16x32xf32>
    %360 = arith.negf %359 : vector<16x32xf32>
    %361 = math.exp %360 : vector<16x32xf32>
    %cst_75 = arith.constant 1.000000e+00 : f32
    %362 = vector.broadcast %cst_75 : f32 to vector<16x32xf32>
    %363 = arith.addf %362, %361 : vector<16x32xf32>
    %364 = arith.divf %362, %363 : vector<16x32xf32>
    %365 = vector.extract_strided_slice %356 {offsets = [0, 32], sizes = [16, 32], strides = [1, 1]} : vector<16x64xf32> to vector<16x32xf32>
    %366 = arith.mulf %365, %343 : vector<16x32xf32>
    %367 = vector.extract_strided_slice %356 {offsets = [0, 0], sizes = [16, 32], strides = [1, 1]} : vector<16x64xf32> to vector<16x32xf32>
    %368 = arith.mulf %367, %358 : vector<16x32xf32>
    %369 = arith.addf %366, %368 : vector<16x32xf32>
    %370 = math.tanh %369 : vector<16x32xf32>
    %371 = arith.mulf %364, %370 : vector<16x32xf32>
    %c80 = arith.constant 80 : index
    %c0_76 = arith.constant 0 : index
    %372 = vector.load %arg9[%c80, %c0_76] : memref<128x32xf32, #tpu.memory_space<vmem>>, vector<16x32xf32>
    tpu.vector_store %arg9[%c80, %c0_76], %371 {strides = array<i32>} : memref<128x32xf32, #tpu.memory_space<vmem>>, vector<16x32xf32>,
    %373 = arith.truncf %371 : vector<16x32xf32> to vector<16x32xbf16>
    %cst_77 = arith.constant dense<0.000000e+00> : vector<16x128xf32>
    %374 = tpu.matmul %373, %3, %cst_77 {dimension_numbers = #tpu.dot_dimension_numbers<[1], [0], [0], [1], [0, 0, 1, 1], [], []>} : vector<16x32xbf16>, vector<32x128xbf16>, vector<16x128xf32> -> vector<16x128xf32>
    %375 = vector.broadcast %4 : vector<1x128xf32> to vector<16x128xf32>
    %376 = arith.addf %375, %374 : vector<16x128xf32>
    %377 = vector.extract_strided_slice %376 {offsets = [0, 0], sizes = [16, 64], strides = [1, 1]} : vector<16x128xf32> to vector<16x64xf32>
    %378 = arith.negf %377 : vector<16x64xf32>
    %379 = math.exp %378 : vector<16x64xf32>
    %cst_78 = arith.constant 1.000000e+00 : f32
    %380 = vector.broadcast %cst_78 : f32 to vector<16x64xf32>
    %381 = arith.addf %380, %379 : vector<16x64xf32>
    %382 = arith.divf %380, %381 : vector<16x64xf32>
    %383 = vector.extract_strided_slice %376 {offsets = [0, 64], sizes = [16, 32], strides = [1, 1]} : vector<16x128xf32> to vector<16x32xf32>
    %384 = math.tanh %383 : vector<16x32xf32>
    %385 = vector.extract_strided_slice %376 {offsets = [0, 96], sizes = [16, 32], strides = [1, 1]} : vector<16x128xf32> to vector<16x32xf32>
    %386 = arith.negf %385 : vector<16x32xf32>
    %387 = math.exp %386 : vector<16x32xf32>
    %cst_79 = arith.constant 1.000000e+00 : f32
    %388 = vector.broadcast %cst_79 : f32 to vector<16x32xf32>
    %389 = arith.addf %388, %387 : vector<16x32xf32>
    %390 = arith.divf %388, %389 : vector<16x32xf32>
    %391 = vector.extract_strided_slice %382 {offsets = [0, 32], sizes = [16, 32], strides = [1, 1]} : vector<16x64xf32> to vector<16x32xf32>
    %392 = arith.mulf %391, %369 : vector<16x32xf32>
    %393 = vector.extract_strided_slice %382 {offsets = [0, 0], sizes = [16, 32], strides = [1, 1]} : vector<16x64xf32> to vector<16x32xf32>
    %394 = arith.mulf %393, %384 : vector<16x32xf32>
    %395 = arith.addf %392, %394 : vector<16x32xf32>
    %396 = math.tanh %395 : vector<16x32xf32>
    %397 = arith.mulf %390, %396 : vector<16x32xf32>
    %c96 = arith.constant 96 : index
    %c0_80 = arith.constant 0 : index
    %398 = vector.load %arg9[%c96, %c0_80] : memref<128x32xf32, #tpu.memory_space<vmem>>, vector<16x32xf32>
    tpu.vector_store %arg9[%c96, %c0_80], %397 {strides = array<i32>} : memref<128x32xf32, #tpu.memory_space<vmem>>, vector<16x32xf32>,
    %399 = arith.truncf %397 : vector<16x32xf32> to vector<16x32xbf16>
    %cst_81 = arith.constant dense<0.000000e+00> : vector<16x128xf32>
    %400 = tpu.matmul %399, %3, %cst_81 {dimension_numbers = #tpu.dot_dimension_numbers<[1], [0], [0], [1], [0, 0, 1, 1], [], []>} : vector<16x32xbf16>, vector<32x128xbf16>, vector<16x128xf32> -> vector<16x128xf32>
    %401 = vector.broadcast %4 : vector<1x128xf32> to vector<16x128xf32>
    %402 = arith.addf %401, %400 : vector<16x128xf32>
    %403 = vector.extract_strided_slice %402 {offsets = [0, 0], sizes = [16, 64], strides = [1, 1]} : vector<16x128xf32> to vector<16x64xf32>
    %404 = arith.negf %403 : vector<16x64xf32>
    %405 = math.exp %404 : vector<16x64xf32>
    %cst_82 = arith.constant 1.000000e+00 : f32
    %406 = vector.broadcast %cst_82 : f32 to vector<16x64xf32>
    %407 = arith.addf %406, %405 : vector<16x64xf32>
    %408 = arith.divf %406, %407 : vector<16x64xf32>
    %409 = vector.extract_strided_slice %402 {offsets = [0, 64], sizes = [16, 32], strides = [1, 1]} : vector<16x128xf32> to vector<16x32xf32>
    %410 = math.tanh %409 : vector<16x32xf32>
    %411 = vector.extract_strided_slice %402 {offsets = [0, 96], sizes = [16, 32], strides = [1, 1]} : vector<16x128xf32> to vector<16x32xf32>
    %412 = arith.negf %411 : vector<16x32xf32>
    %413 = math.exp %412 : vector<16x32xf32>
    %cst_83 = arith.constant 1.000000e+00 : f32
    %414 = vector.broadcast %cst_83 : f32 to vector<16x32xf32>
    %415 = arith.addf %414, %413 : vector<16x32xf32>
    %416 = arith.divf %414, %415 : vector<16x32xf32>
    %417 = vector.extract_strided_slice %408 {offsets = [0, 32], sizes = [16, 32], strides = [1, 1]} : vector<16x64xf32> to vector<16x32xf32>
    %418 = arith.mulf %417, %395 : vector<16x32xf32>
    %419 = vector.extract_strided_slice %408 {offsets = [0, 0], sizes = [16, 32], strides = [1, 1]} : vector<16x64xf32> to vector<16x32xf32>
    %420 = arith.mulf %419, %410 : vector<16x32xf32>
    %421 = arith.addf %418, %420 : vector<16x32xf32>
    %422 = math.tanh %421 : vector<16x32xf32>
    %423 = arith.mulf %416, %422 : vector<16x32xf32>
    %c112 = arith.constant 112 : index
    %c0_84 = arith.constant 0 : index
    %424 = vector.load %arg9[%c112, %c0_84] : memref<128x32xf32, #tpu.memory_space<vmem>>, vector<16x32xf32>
    tpu.vector_store %arg9[%c112, %c0_84], %423 {strides = array<i32>} : memref<128x32xf32, #tpu.memory_space<vmem>>, vector<16x32xf32>,
    %c0_85 = arith.constant 0 : index
    %c0_86 = arith.constant 0 : index
    %425 = vector.load %arg9[%c0_85, %c0_86] : memref<128x32xf32, #tpu.memory_space<vmem>>, vector<128x32xf32>
    %426 = arith.truncf %425 : vector<128x32xf32> to vector<128x32xbf16>
    %c0_87 = arith.constant 0 : index
    %c0_88 = arith.constant 0 : index
    %427 = vector.load %arg5[%c0_87, %c0_88] : memref<32x128xf32, #tpu.memory_space<vmem>>, vector<32x128xf32>
    %428 = arith.truncf %427 : vector<32x128xf32> to vector<32x128xbf16>
    %cst_89 = arith.constant dense<0.000000e+00> : vector<128x128xf32>
    %429 = tpu.matmul %426, %428, %cst_89 {dimension_numbers = #tpu.dot_dimension_numbers<[1], [0], [0], [1], [0, 0, 1, 1], [], []>} : vector<128x32xbf16>, vector<32x128xbf16>, vector<128x128xf32> -> vector<128x128xf32>
    %c0_90 = arith.constant 0 : index
    %c0_91 = arith.constant 0 : index
    %430 = vector.load %arg6[%c0_90, %c0_91] : memref<1x128xf32, #tpu.memory_space<vmem>>, vector<1x128xf32>
    %431 = vector.broadcast %430 : vector<1x128xf32> to vector<128x128xf32>
    %432 = arith.addf %429, %431 : vector<128x128xf32>
    %433 = vector.shape_cast %432 : vector<128x128xf32> to vector<8x16x128xf32>
    %c0_92 = arith.constant 0 : index
    %c0_93 = arith.constant 0 : index
    %c0_94 = arith.constant 0 : index
    %434 = vector.load %arg8[%c0_92, %c0_93, %c0_94] : memref<8x16x128xf32, #tpu.memory_space<vmem>>, vector<8x16x128xf32>
    tpu.vector_store %arg8[%c0_92, %c0_93, %c0_94], %433 {strides = array<i32>} : memref<8x16x128xf32, #tpu.memory_space<vmem>>, vector<8x16x128xf32>,
    return
  }
  func.func @transform_0(%arg0: i32) -> (i32, i32, i32) {
    %c0_i32 = arith.constant 0 : i32
    %c0_i32_0 = arith.constant 0 : i32
    %c0_i32_1 = arith.constant 0 : i32
    return %c0_i32, %arg0, %c0_i32_0 : i32, i32, i32
  }
  func.func @transform_1(%arg0: i32) -> (i32, i32) {
    %c0_i32 = arith.constant 0 : i32
    %c0_i32_0 = arith.constant 0 : i32
    %c0_i32_1 = arith.constant 0 : i32
    return %c0_i32, %c0_i32_0 : i32, i32
  }
  func.func @transform_2(%arg0: i32) -> (i32, i32) {
    %c0_i32 = arith.constant 0 : i32
    %c0_i32_0 = arith.constant 0 : i32
    %c0_i32_1 = arith.constant 0 : i32
    return %c0_i32, %c0_i32_0 : i32, i32
  }
  func.func @transform_3(%arg0: i32) -> (i32, i32) {
    %c0_i32 = arith.constant 0 : i32
    %c0_i32_0 = arith.constant 0 : i32
    %c0_i32_1 = arith.constant 0 : i32
    return %c0_i32, %c0_i32_0 : i32, i32
  }
  func.func @transform_4(%arg0: i32) -> (i32, i32) {
    %c0_i32 = arith.constant 0 : i32
    %c0_i32_0 = arith.constant 0 : i32
    %c0_i32_1 = arith.constant 0 : i32
    return %c0_i32, %c0_i32_0 : i32, i32
  }
  func.func @transform_5(%arg0: i32) -> (i32, i32) {
    %c0_i32 = arith.constant 0 : i32
    %c0_i32_0 = arith.constant 0 : i32
    %c0_i32_1 = arith.constant 0 : i32
    return %c0_i32, %c0_i32_0 : i32, i32
  }
  func.func @transform_6(%arg0: i32) -> (i32, i32) {
    %c0_i32 = arith.constant 0 : i32
    %c0_i32_0 = arith.constant 0 : i32
    return %arg0, %c0_i32 : i32, i32
  }
  func.func @transform_7(%arg0: i32) -> (i32, i32, i32) {
    %c0_i32 = arith.constant 0 : i32
    %c0_i32_0 = arith.constant 0 : i32
    %c0_i32_1 = arith.constant 0 : i32
    return %c0_i32, %arg0, %c0_i32_0 : i32, i32, i32
  }
}

</mosaic_0001>

<llo_original>
// kernel: samaf_pallas.1
$region0: #{samaf_pallas.1}
  #allocation0 [shape = 'u32[]', space=smem, size = 0x4, offset = 0x4, fixed_abs, tag = 'smem constant byte address 0x4 - core index']
  #allocation1 [shape = 'u32[72,128]{1,0:T(1,128)}', space=vmem, size = 0x9000, scoped, tag = 'internal scratch']
  #allocation2 [shape = 'f32[128,32]{1,0:T(8,128)}', space=vmem, size = 0x10000, scoped, tag = 'scratch operand']
  %s0 = inlined_call_operand.vmem [shape: f32[8,16,128], index: 0, kind: input, shape index: {}]
  %s1 = inlined_call_operand.vmem [shape: f32[32,128], index: 1, kind: input, shape index: {}]
  %s2 = inlined_call_operand.vmem [shape: f32[32,128], index: 2, kind: input, shape index: {}]
  %s3 = inlined_call_operand.vmem [shape: f32[1,128], index: 3, kind: input, shape index: {}]
  %s4 = inlined_call_operand.vmem [shape: f32[32,128], index: 4, kind: input, shape index: {}]
  %s5 = inlined_call_operand.vmem [shape: f32[1,128], index: 5, kind: input, shape index: {}]
  %s6 = inlined_call_operand.hbm [shape: f32[16,32], index: 6, kind: output, shape index: {0}]
  %s7 = inlined_call_operand.vmem [shape: f32[8,16,128], index: 7, kind: output, shape index: {1}]
  %8 = xla_tuple %s6, %s7
  %s9 = sld [smem:[#allocation0]]
  $region42: #{samaf_pallas.1} parent=0
    _
  %s11 = ssub.s32 1, %s9
  %s12 = scalar_select 0, %s11, %s9
  $region1: #{samaf_pallas.1} parent=0
    #allocation3 [shape = 'u8[8192]{0}', space=vmem, size = 0x2000, scoped, tag = 'output window, operand 0, single buffered']
    #allocation4 [shape = 's32[1]{0}', space=sflag, size = 0x4, scoped, tag = 'scoped memory for samaf_pallas.1']
    %13 = vsyncpa [#allocation4], 0
    // Predicated region
    $region2: #{samaf_pallas.1} parent=1 // pred_check
      _
    $region3: #{samaf_pallas.1} parent=1 // pred_check_branch
      %15 = sbr.rel (0) target = $region5
    $region4: #{samaf_pallas.1} parent=1 // pred_region
      _
    $region5: #{samaf_pallas.1} parent=1 // pred_fallthru
      _
    // Predicated region
    $region6: #{samaf_pallas.1} parent=1 // pred_check
      _
    $region7: #{samaf_pallas.1} parent=1 // pred_check_branch
      %17 = sbr.rel (0) target = $region9
    $region8: #{samaf_pallas.1} parent=1 // pred_region
      _
    $region9: #{samaf_pallas.1} parent=1 // pred_fallthru
      _
    // Predicated region
    $region10: #{samaf_pallas.1} parent=1 // pred_check
      _
    $region11: #{samaf_pallas.1} parent=1 // pred_check_branch
      %19 = sbr.rel (0) target = $region13
    $region12: #{samaf_pallas.1} parent=1 // pred_region
      _
    $region13: #{samaf_pallas.1} parent=1 // pred_fallthru
      _
    // Predicated region
    $region14: #{samaf_pallas.1} parent=1 // pred_check
      _
    $region15: #{samaf_pallas.1} parent=1 // pred_check_branch
      %21 = sbr.rel (0) target = $region17
    $region16: #{samaf_pallas.1} parent=1 // pred_region
      _
    $region17: #{samaf_pallas.1} parent=1 // pred_fallthru
      _
    // Predicated region
    $region18: #{samaf_pallas.1} parent=1 // pred_check
      _
    $region19: #{samaf_pallas.1} parent=1 // pred_check_branch
      %23 = sbr.rel (0) target = $region21
    $region20: #{samaf_pallas.1} parent=1 // pred_region
      _
    $region21: #{samaf_pallas.1} parent=1 // pred_fallthru
      _
    // Predicated region
    $region22: #{samaf_pallas.1} parent=1 // pred_check
      _
    $region23: #{samaf_pallas.1} parent=1 // pred_check_branch
      %25 = sbr.rel (0) target = $region25
    $region24: #{samaf_pallas.1} parent=1 // pred_region
      _
    $region25: #{samaf_pallas.1} parent=1 // pred_fallthru
      _
    %v27 = vld [vmem:[%s1] sm:$0xff]
    %v28 = vld [vmem:[%s1 + $0x8] sm:$0xff]
    %v29 = vld [vmem:[%s1 + $0x10] sm:$0xff]
    %v30 = vld [vmem:[%s1 + $0x18] sm:$0xff]
    %v31 = vpack.c.bf16 %v28, %v27
    %v32 = vpack.c.bf16 %v30, %v29
    %v33 = vld [vmem:[%s2] sm:$0xff]
    %v34 = vld [vmem:[%s2 + $0x8] sm:$0xff]
    %v35 = vld [vmem:[%s2 + $0x10] sm:$0xff]
    %v36 = vld [vmem:[%s2 + $0x18] sm:$0xff]
    %v37 = vpack.c.bf16 %v34, %v33
    %v38 = vpack.c.bf16 %v36, %v35
    %v39 = vld [vmem:[%s3] sm:$0x1]
    %v40 = vld [vmem:[%s0] sm:$0xff]
    %v41 = vld [vmem:[%s0 + $0x8] sm:$0xff]
    %vm42 = vcmask 261120
    %v44 = vsel %vm42, 0, 0
    %46 = vmatpush.bf16.msra.mxu0 0
    %47 = vmatpush.bf16.msra.mxu0 0
    %48 = vmatpush.bf16.msra.mxu0 0
    %49 = vmatpush.bf16.msra.mxu0 0
    %50 = vmatpush.bf16.msra.mxu0 0
    %51 = vmatpush.bf16.msra.mxu0 0
    %52 = vmatpush.bf16.msra.mxu0 %v32
    %53 = vmatpush.bf16.msra.mxu0 %v31
    %54 = vmatmul.bf16.gmra.mxu0 %v44
    %v55 = vpop.f32.mrf.mxu0
    %v56 = vadd.f32 0.0, %v55
    %v57 = vpop.f32.mrf.mxu0
    %v58 = vadd.f32 0.0, %v57
    %59 = vdwg.mxu0
    %v60 = vadd.f32 %v40, %v56
    %v61 = vadd.f32 %v41, %v58
    %v62 = vxor.u32 %v60, 2147483648
    %v63 = vxor.u32 %v61, 2147483648
    %v64 = vmul.f32 %v62, 1.442695
    %v65 = vpow.pop %v64
    %v66 = vmul.f32 %v63, 1.442695
    %v67 = vpow.pop %v66
    %v68 = vadd.f32 %v65, 1.0
    %v69 = vadd.f32 %v67, 1.0
    %v70 = vrcp.pop %v68
    %v71 = vmul.f32 %v68, %v70
    %v72 = vsub.f32 1.0, %v71
    %v73 = vmul.f32 %v70, %v72
    %v74 = vadd.f32 %v70, %v73
    %vm75 = vweird.f32 %v68
    %vm76 = vweird.f32 %v70
    %vm77 = vmor %vm75, %vm76
    %v78 = vsel %vm77, %v70, %v74
    %v79 = vand.u32 2147483647, %v68
    %vm80 = vcmp.eq.f32.partialorder %v79, 8.507059e+37
    %v81 = vand.u32 %v68, 2147483648
    %v82 = vor.u32 1.1754944e-38, %v81
    %v83 = vsel %vm80, %v82, %v78
    %v84 = vmul.f32 1.0, %v83
    %v85 = vrcp.pop %v69
    %v86 = vmul.f32 %v69, %v85
    %v87 = vsub.f32 1.0, %v86
    %v88 = vmul.f32 %v85, %v87
    %v89 = vadd.f32 %v85, %v88
    %vm90 = vweird.f32 %v69
    %vm91 = vweird.f32 %v85
    %vm92 = vmor %vm90, %vm91
    %v93 = vsel %vm92, %v85, %v89
    %v94 = vand.u32 2147483647, %v69
    %vm95 = vcmp.eq.f32.partialorder %v94, 8.507059e+37
    %v96 = vand.u32 %v69, 2147483648
    %v97 = vor.u32 1.1754944e-38, %v96
    %v98 = vsel %vm95, %v97, %v93
    %v99 = vmul.f32 1.0, %v98
    %v100 = vtanh.pop %v60
    %v101 = vtanh.pop %v61
    %v102 = vmul.f32 %v84, 0.0
    %v103 = vmul.f32 %v99, 0.0
    %106 = vrot.lane.b32.xlu0 %v100, 64
    %v107 = vpop.permute.xlu0 %106
    %108 = vrot.lane.b32.xlu0 %v101, 64
    %v109 = vpop.permute.xlu0 %108
    %v112 = vmul.f32 %v84, %v107
    %v113 = vmul.f32 %v99, %v109
    %116 = vrot.lane.b32.xlu0 %v112, 32
    %v117 = vpop.permute.xlu0 %116
    %118 = vrot.lane.b32.xlu0 %v113, 32
    %v119 = vpop.permute.xlu0 %118
    %v122 = vadd.f32 %v102, %v117
    %v123 = vadd.f32 %v103, %v119
    %v124 = vtanh.pop %v122
    %v125 = vtanh.pop %v123
    %128 = vrot.lane.b32.xlu0 %v124, 64
    %v129 = vpop.permute.xlu0 %128
    %130 = vrot.lane.b32.xlu0 %v125, 64
    %v131 = vpop.permute.xlu0 %130
    %v134 = vmul.f32 %v84, %v129
    %v135 = vmul.f32 %v99, %v131
    %s136 = scalar_lea.vmem %s0, 16
    %v137 = vld [vmem:[%s136] sm:$0xff]
    %v138 = vld [vmem:[%s136 + $0x8] sm:$0xff]
    %v139 = vpack.c.bf16 %v135, %v134
    %141 = vrot.lane.b32.xlu0 %v139, 32
    %v142 = vpop.permute.xlu0 %141
    %v144 = vsel %vm42, %v142, 0
    %146 = vmatpush.bf16.msra.mxu0 0
    %147 = vmatpush.bf16.msra.mxu0 0
    %148 = vmatpush.bf16.msra.mxu0 0
    %149 = vmatpush.bf16.msra.mxu0 0
    %150 = vmatpush.bf16.msra.mxu0 0
    %151 = vmatpush.bf16.msra.mxu0 0
    %152 = vmatpush.bf16.msra.mxu0 %v32
    %153 = vmatpush.bf16.msra.mxu0 %v31
    %154 = vmatmul.bf16.gmra.mxu0 %v144
    %v155 = vpop.f32.mrf.mxu0
    %v156 = vadd.f32 0.0, %v155
    %v157 = vpop.f32.mrf.mxu0
    %v158 = vadd.f32 0.0, %v157
    %159 = vdwg.mxu0
    %v160 = vadd.f32 %v137, %v156
    %v161 = vadd.f32 %v138, %v158
    %v162 = vxor.u32 %v160, 2147483648
    %v163 = vxor.u32 %v161, 2147483648
    %v164 = vmul.f32 %v162, 1.442695
    %v165 = vpow.pop %v164
    %v166 = vmul.f32 %v163, 1.442695
    %v167 = vpow.pop %v166
    %v168 = vadd.f32 %v165, 1.0
    %v169 = vadd.f32 %v167, 1.0
    %v170 = vrcp.pop %v168
    %v171 = vmul.f32 %v168, %v170
    %v172 = vsub.f32 1.0, %v171
    %v173 = vmul.f32 %v170, %v172
    %v174 = vadd.f32 %v170, %v173
    %vm175 = vweird.f32 %v168
    %vm176 = vweird.f32 %v170
    %vm177 = vmor %vm175, %vm176
    %v178 = vsel %vm177, %v170, %v174
    %v179 = vand.u32 2147483647, %v168
    %vm180 = vcmp.eq.f32.partialorder %v179, 8.507059e+37
    %v181 = vand.u32 %v168, 2147483648
    %v182 = vor.u32 1.1754944e-38, %v181
    %v183 = vsel %vm180, %v182, %v178
    %v184 = vmul.f32 1.0, %v183
    %v185 = vrcp.pop %v169
    %v186 = vmul.f32 %v169, %v185
    %v187 = vsub.f32 1.0, %v186
    %v188 = vmul.f32 %v185, %v187
    %v189 = vadd.f32 %v185, %v188
    %vm190 = vweird.f32 %v169
    %vm191 = vweird.f32 %v185
    %vm192 = vmor %vm190, %vm191
    %v193 = vsel %vm192, %v185, %v189
    %v194 = vand.u32 2147483647, %v169
    %vm195 = vcmp.eq.f32.partialorder %v194, 8.507059e+37
    %v196 = vand.u32 %v169, 2147483648
    %v197 = vor.u32 1.1754944e-38, %v196
    %v198 = vsel %vm195, %v197, %v193
    %v199 = vmul.f32 1.0, %v198
    %v200 = vtanh.pop %v160
    %v201 = vtanh.pop %v161
    %v202 = vmul.f32 %v184, %v122
    %v203 = vmul.f32 %v199, %v123
    %206 = vrot.lane.b32.xlu0 %v200, 64
    %v207 = vpop.permute.xlu0 %206
    %208 = vrot.lane.b32.xlu0 %v201, 64
    %v209 = vpop.permute.xlu0 %208
    %v212 = vmul.f32 %v184, %v207
    %v213 = vmul.f32 %v199, %v209
    %216 = vrot.lane.b32.xlu0 %v212, 32
    %v217 = vpop.permute.xlu0 %216
    %218 = vrot.lane.b32.xlu0 %v213, 32
    %v219 = vpop.permute.xlu0 %218
    %v222 = vadd.f32 %v202, %v217
    %v223 = vadd.f32 %v203, %v219
    %v224 = vtanh.pop %v222
    %v225 = vtanh.pop %v223
    %228 = vrot.lane.b32.xlu0 %v224, 64
    %v229 = vpop.permute.xlu0 %228
    %230 = vrot.lane.b32.xlu0 %v225, 64
    %v231 = vpop.permute.xlu0 %230
    %v234 = vmul.f32 %v184, %v229
    %v235 = vmul.f32 %v199, %v231
    %s236 = scalar_lea.vmem %s0, 32
    %v237 = vld [vmem:[%s236] sm:$0xff]
    %v238 = vld [vmem:[%s236 + $0x8] sm:$0xff]
    %v239 = vpack.c.bf16 %v235, %v234
    %241 = vrot.lane.b32.xlu0 %v239, 32
    %v242 = vpop.permute.xlu0 %241
    %v244 = vsel %vm42, %v242, 0
    %246 = vmatpush.bf16.msra.mxu0 0
    %247 = vmatpush.bf16.msra.mxu0 0
    %248 = vmatpush.bf16.msra.mxu0 0
    %249 = vmatpush.bf16.msra.mxu0 0
    %250 = vmatpush.bf16.msra.mxu0 0
    %251 = vmatpush.bf16.msra.mxu0 0
    %252 = vmatpush.bf16.msra.mxu0 %v32
    %253 = vmatpush.bf16.msra.mxu0 %v31
    %254 = vmatmul.bf16.gmra.mxu0 %v244
    %v255 = vpop.f32.mrf.mxu0
    %v256 = vadd.f32 0.0, %v255
    %v257 = vpop.f32.mrf.mxu0
    %v258 = vadd.f32 0.0, %v257
    %259 = vdwg.mxu0
    %v260 = vadd.f32 %v237, %v256
    %v261 = vadd.f32 %v238, %v258
    %v262 = vxor.u32 %v260, 2147483648
    %v263 = vxor.u32 %v261, 2147483648
    %v264 = vmul.f32 %v262, 1.442695
    %v265 = vpow.pop %v264
    %v266 = vmul.f32 %v263, 1.442695
    %v267 = vpow.pop %v266
    %v268 = vadd.f32 %v265, 1.0
    %v269 = vadd.f32 %v267, 1.0
    %v270 = vrcp.pop %v268
    %v271 = vmul.f32 %v268, %v270
    %v272 = vsub.f32 1.0, %v271
    %v273 = vmul.f32 %v270, %v272
    %v274 = vadd.f32 %v270, %v273
    %vm275 = vweird.f32 %v268
    %vm276 = vweird.f32 %v270
    %vm277 = vmor %vm275, %vm276
    %v278 = vsel %vm277, %v270, %v274
    %v279 = vand.u32 2147483647, %v268
    %vm280 = vcmp.eq.f32.partialorder %v279, 8.507059e+37
    %v281 = vand.u32 %v268, 2147483648
    %v282 = vor.u32 1.1754944e-38, %v281
    %v283 = vsel %vm280, %v282, %v278
    %v284 = vmul.f32 1.0, %v283
    %v285 = vrcp.pop %v269
    %v286 = vmul.f32 %v269, %v285
    %v287 = vsub.f32 1.0, %v286
    %v288 = vmul.f32 %v285, %v287
    %v289 = vadd.f32 %v285, %v288
    %vm290 = vweird.f32 %v269
    %vm291 = vweird.f32 %v285
    %vm292 = vmor %vm290, %vm291
    %v293 = vsel %vm292, %v285, %v289
    %v294 = vand.u32 2147483647, %v269
    %vm295 = vcmp.eq.f32.partialorder %v294, 8.507059e+37
    %v296 = vand.u32 %v269, 2147483648
    %v297 = vor.u32 1.1754944e-38, %v296
    %v298 = vsel %vm295, %v297, %v293
    %v299 = vmul.f32 1.0, %v298
    %v300 = vtanh.pop %v260
    %v301 = vtanh.pop %v261
    %v302 = vmul.f32 %v284, %v222
    %v303 = vmul.f32 %v299, %v223
    %306 = vrot.lane.b32.xlu0 %v300, 64
    %v307 = vpop.permute.xlu0 %306
    %308 = vrot.lane.b32.xlu0 %v301, 64
    %v309 = vpop.permute.xlu0 %308
    %v312 = vmul.f32 %v284, %v307
    %v313 = vmul.f32 %v299, %v309
    %316 = vrot.lane.b32.xlu0 %v312, 32
    %v317 = vpop.permute.xlu0 %316
    %318 = vrot.lane.b32.xlu0 %v313, 32
    %v319 = vpop.permute.xlu0 %318
    %v322 = vadd.f32 %v302, %v317
    %v323 = vadd.f32 %v303, %v319
    %v324 = vtanh.pop %v322
    %v325 = vtanh.pop %v323
    %328 = vrot.lane.b32.xlu0 %v324, 64
    %v329 = vpop.permute.xlu0 %328
    %330 = vrot.lane.b32.xlu0 %v325, 64
    %v331 = vpop.permute.xlu0 %330
    %v334 = vmul.f32 %v284, %v329
    %v335 = vmul.f32 %v299, %v331
    %s336 = scalar_lea.vmem %s0, 48
    %v337 = vld [vmem:[%s336] sm:$0xff]
    %v338 = vld [vmem:[%s336 + $0x8] sm:$0xff]
    %v339 = vpack.c.bf16 %v335, %v334
    %341 = vrot.lane.b32.xlu0 %v339, 32
    %v342 = vpop.permute.xlu0 %341
    %v344 = vsel %vm42, %v342, 0
    %346 = vmatpush.bf16.msra.mxu0 0
    %347 = vmatpush.bf16.msra.mxu0 0
    %348 = vmatpush.bf16.msra.mxu0 0
    %349 = vmatpush.bf16.msra.mxu0 0
    %350 = vmatpush.bf16.msra.mxu0 0
    %351 = vmatpush.bf16.msra.mxu0 0
    %352 = vmatpush.bf16.msra.mxu0 %v32
    %353 = vmatpush.bf16.msra.mxu0 %v31
    %354 = vmatmul.bf16.gmra.mxu0 %v344
    %v355 = vpop.f32.mrf.mxu0
    %v356 = vadd.f32 0.0, %v355
    %v357 = vpop.f32.mrf.mxu0
    %v358 = vadd.f32 0.0, %v357
    %359 = vdwg.mxu0
    %v360 = vadd.f32 %v337, %v356
    %v361 = vadd.f32 %v338, %v358
    %v362 = vxor.u32 %v360, 2147483648
    %v363 = vxor.u32 %v361, 2147483648
    %v364 = vmul.f32 %v362, 1.442695
    %v365 = vpow.pop %v364
    %v366 = vmul.f32 %v363, 1.442695
    %v367 = vpow.pop %v366
    %v368 = vadd.f32 %v365, 1.0
    %v369 = vadd.f32 %v367, 1.0
    %v370 = vrcp.pop %v368
    %v371 = vmul.f32 %v368, %v370
    %v372 = vsub.f32 1.0, %v371
    %v373 = vmul.f32 %v370, %v372
    %v374 = vadd.f32 %v370, %v373
    %vm375 = vweird.f32 %v368
    %vm376 = vweird.f32 %v370
    %vm377 = vmor %vm375, %vm376
    %v378 = vsel %vm377, %v370, %v374
    %v379 = vand.u32 2147483647, %v368
    %vm380 = vcmp.eq.f32.partialorder %v379, 8.507059e+37
    %v381 = vand.u32 %v368, 2147483648
    %v382 = vor.u32 1.1754944e-38, %v381
    %v383 = vsel %vm380, %v382, %v378
    %v384 = vmul.f32 1.0, %v383
    %v385 = vrcp.pop %v369
    %v386 = vmul.f32 %v369, %v385
    %v387 = vsub.f32 1.0, %v386
    %v388 = vmul.f32 %v385, %v387
    %v389 = vadd.f32 %v385, %v388
    %vm390 = vweird.f32 %v369
    %vm391 = vweird.f32 %v385
    %vm392 = vmor %vm390, %vm391
    %v393 = vsel %vm392, %v385, %v389
    %v394 = vand.u32 2147483647, %v369
    %vm395 = vcmp.eq.f32.partialorder %v394, 8.507059e+37
    %v396 = vand.u32 %v369, 2147483648
    %v397 = vor.u32 1.1754944e-38, %v396
    %v398 = vsel %vm395, %v397, %v393
    %v399 = vmul.f32 1.0, %v398
    %v400 = vtanh.pop %v360
    %v401 = vtanh.pop %v361
    %v402 = vmul.f32 %v384, %v322
    %v403 = vmul.f32 %v399, %v323
    %406 = vrot.lane.b32.xlu0 %v400, 64
    %v407 = vpop.permute.xlu0 %406
    %408 = vrot.lane.b32.xlu0 %v401, 64
    %v409 = vpop.permute.xlu0 %408
    %v412 = vmul.f32 %v384, %v407
    %v413 = vmul.f32 %v399, %v409
    %416 = vrot.lane.b32.xlu0 %v412, 32
    %v417 = vpop.permute.xlu0 %416
    %418 = vrot.lane.b32.xlu0 %v413, 32
    %v419 = vpop.permute.xlu0 %418
    %v422 = vadd.f32 %v402, %v417
    %v423 = vadd.f32 %v403, %v419
    %v424 = vtanh.pop %v422
    %v425 = vtanh.pop %v423
    %428 = vrot.lane.b32.xlu0 %v424, 64
    %v429 = vpop.permute.xlu0 %428
    %430 = vrot.lane.b32.xlu0 %v425, 64
    %v431 = vpop.permute.xlu0 %430
    %v434 = vmul.f32 %v384, %v429
    %v435 = vmul.f32 %v399, %v431
    %s436 = scalar_lea.vmem %s0, 64
    %v437 = vld [vmem:[%s436] sm:$0xff]
    %v438 = vld [vmem:[%s436 + $0x8] sm:$0xff]
    %v439 = vpack.c.bf16 %v435, %v434
    %441 = vrot.lane.b32.xlu0 %v439, 32
    %v442 = vpop.permute.xlu0 %441
    %v444 = vsel %vm42, %v442, 0
    %446 = vmatpush.bf16.msra.mxu0 0
    %447 = vmatpush.bf16.msra.mxu0 0
    %448 = vmatpush.bf16.msra.mxu0 0
    %449 = vmatpush.bf16.msra.mxu0 0
    %450 = vmatpush.bf16.msra.mxu0 0
    %451 = vmatpush.bf16.msra.mxu0 0
    %452 = vmatpush.bf16.msra.mxu0 %v32
    %453 = vmatpush.bf16.msra.mxu0 %v31
    %454 = vmatmul.bf16.gmra.mxu0 %v444
    %v455 = vpop.f32.mrf.mxu0
    %v456 = vadd.f32 0.0, %v455
    %v457 = vpop.f32.mrf.mxu0
    %v458 = vadd.f32 0.0, %v457
    %459 = vdwg.mxu0
    %v460 = vadd.f32 %v437, %v456
    %v461 = vadd.f32 %v438, %v458
    %v462 = vxor.u32 %v460, 2147483648
    %v463 = vxor.u32 %v461, 2147483648
    %v464 = vmul.f32 %v462, 1.442695
    %v465 = vpow.pop %v464
    %v466 = vmul.f32 %v463, 1.442695
    %v467 = vpow.pop %v466
    %v468 = vadd.f32 %v465, 1.0
    %v469 = vadd.f32 %v467, 1.0
    %v470 = vrcp.pop %v468
    %v471 = vmul.f32 %v468, %v470
    %v472 = vsub.f32 1.0, %v471
    %v473 = vmul.f32 %v470, %v472
    %v474 = vadd.f32 %v470, %v473
    %vm475 = vweird.f32 %v468
    %vm476 = vweird.f32 %v470
    %vm477 = vmor %vm475, %vm476
    %v478 = vsel %vm477, %v470, %v474
    %v479 = vand.u32 2147483647, %v468
    %vm480 = vcmp.eq.f32.partialorder %v479, 8.507059e+37
    %v481 = vand.u32 %v468, 2147483648
    %v482 = vor.u32 1.1754944e-38, %v481
    %v483 = vsel %vm480, %v482, %v478
    %v484 = vmul.f32 1.0, %v483
    %v485 = vrcp.pop %v469
    %v486 = vmul.f32 %v469, %v485
    %v487 = vsub.f32 1.0, %v486
    %v488 = vmul.f32 %v485, %v487
    %v489 = vadd.f32 %v485, %v488
    %vm490 = vweird.f32 %v469
    %vm491 = vweird.f32 %v485
    %vm492 = vmor %vm490, %vm491
    %v493 = vsel %vm492, %v485, %v489
    %v494 = vand.u32 2147483647, %v469
    %vm495 = vcmp.eq.f32.partialorder %v494, 8.507059e+37
    %v496 = vand.u32 %v469, 2147483648
    %v497 = vor.u32 1.1754944e-38, %v496
    %v498 = vsel %vm495, %v497, %v493
    %v499 = vmul.f32 1.0, %v498
    %v500 = vtanh.pop %v460
    %v501 = vtanh.pop %v461
    %v502 = vmul.f32 %v484, %v422
    %v503 = vmul.f32 %v499, %v423
    %506 = vrot.lane.b32.xlu0 %v500, 64
    %v507 = vpop.permute.xlu0 %506
    %508 = vrot.lane.b32.xlu0 %v501, 64
    %v509 = vpop.permute.xlu0 %508
    %v512 = vmul.f32 %v484, %v507
    %v513 = vmul.f32 %v499, %v509
    %516 = vrot.lane.b32.xlu0 %v512, 32
    %v517 = vpop.permute.xlu0 %516
    %518 = vrot.lane.b32.xlu0 %v513, 32
    %v519 = vpop.permute.xlu0 %518
    %v522 = vadd.f32 %v502, %v517
    %v523 = vadd.f32 %v503, %v519
    %v524 = vtanh.pop %v522
    %v525 = vtanh.pop %v523
    %528 = vrot.lane.b32.xlu0 %v524, 64
    %v529 = vpop.permute.xlu0 %528
    %530 = vrot.lane.b32.xlu0 %v525, 64
    %v531 = vpop.permute.xlu0 %530
    %v534 = vmul.f32 %v484, %v529
    %v535 = vmul.f32 %v499, %v531
    %s536 = scalar_lea.vmem %s0, 80
    %v537 = vld [vmem:[%s536] sm:$0xff]
    %v538 = vld [vmem:[%s536 + $0x8] sm:$0xff]
    %v539 = vpack.c.bf16 %v535, %v534
    %541 = vrot.lane.b32.xlu0 %v539, 32
    %v542 = vpop.permute.xlu0 %541
    %v544 = vsel %vm42, %v542, 0
    %546 = vmatpush.bf16.msra.mxu0 0
    %547 = vmatpush.bf16.msra.mxu0 0
    %548 = vmatpush.bf16.msra.mxu0 0
    %549 = vmatpush.bf16.msra.mxu0 0
    %550 = vmatpush.bf16.msra.mxu0 0
    %551 = vmatpush.bf16.msra.mxu0 0
    %552 = vmatpush.bf16.msra.mxu0 %v32
    %553 = vmatpush.bf16.msra.mxu0 %v31
    %554 = vmatmul.bf16.gmra.mxu0 %v544
    %v555 = vpop.f32.mrf.mxu0
    %v556 = vadd.f32 0.0, %v555
    %v557 = vpop.f32.mrf.mxu0
    %v558 = vadd.f32 0.0, %v557
    %559 = vdwg.mxu0
    %v560 = vadd.f32 %v537, %v556
    %v561 = vadd.f32 %v538, %v558
    %v562 = vxor.u32 %v560, 2147483648
    %v563 = vxor.u32 %v561, 2147483648
    %v564 = vmul.f32 %v562, 1.442695
    %v565 = vpow.pop %v564
    %v566 = vmul.f32 %v563, 1.442695
    %v567 = vpow.pop %v566
    %v568 = vadd.f32 %v565, 1.0
    %v569 = vadd.f32 %v567, 1.0
    %v570 = vrcp.pop %v568
    %v571 = vmul.f32 %v568, %v570
    %v572 = vsub.f32 1.0, %v571
    %v573 = vmul.f32 %v570, %v572
    %v574 = vadd.f32 %v570, %v573
    %vm575 = vweird.f32 %v568
    %vm576 = vweird.f32 %v570
    %vm577 = vmor %vm575, %vm576
    %v578 = vsel %vm577, %v570, %v574
    %v579 = vand.u32 2147483647, %v568
    %vm580 = vcmp.eq.f32.partialorder %v579, 8.507059e+37
    %v581 = vand.u32 %v568, 2147483648
    %v582 = vor.u32 1.1754944e-38, %v581
    %v583 = vsel %vm580, %v582, %v578
    %v584 = vmul.f32 1.0, %v583
    %v585 = vrcp.pop %v569
    %v586 = vmul.f32 %v569, %v585
    %v587 = vsub.f32 1.0, %v586
    %v588 = vmul.f32 %v585, %v587
    %v589 = vadd.f32 %v585, %v588
    %vm590 = vweird.f32 %v569
    %vm591 = vweird.f32 %v585
    %vm592 = vmor %vm590, %vm591
    %v593 = vsel %vm592, %v585, %v589
    %v594 = vand.u32 2147483647, %v569
    %vm595 = vcmp.eq.f32.partialorder %v594, 8.507059e+37
    %v596 = vand.u32 %v569, 2147483648
    %v597 = vor.u32 1.1754944e-38, %v596
    %v598 = vsel %vm595, %v597, %v593
    %v599 = vmul.f32 1.0, %v598
    %v600 = vtanh.pop %v560
    %v601 = vtanh.pop %v561
    %v602 = vmul.f32 %v584, %v522
    %v603 = vmul.f32 %v599, %v523
    %606 = vrot.lane.b32.xlu0 %v600, 64
    %v607 = vpop.permute.xlu0 %606
    %608 = vrot.lane.b32.xlu0 %v601, 64
    %v609 = vpop.permute.xlu0 %608
    %v612 = vmul.f32 %v584, %v607
    %v613 = vmul.f32 %v599, %v609
    %616 = vrot.lane.b32.xlu0 %v612, 32
    %v617 = vpop.permute.xlu0 %616
    %618 = vrot.lane.b32.xlu0 %v613, 32
    %v619 = vpop.permute.xlu0 %618
    %v622 = vadd.f32 %v602, %v617
    %v623 = vadd.f32 %v603, %v619
    %v624 = vtanh.pop %v622
    %v625 = vtanh.pop %v623
    %628 = vrot.lane.b32.xlu0 %v624, 64
    %v629 = vpop.permute.xlu0 %628
    %630 = vrot.lane.b32.xlu0 %v625, 64
    %v631 = vpop.permute.xlu0 %630
    %v634 = vmul.f32 %v584, %v629
    %v635 = vmul.f32 %v599, %v631
    %s636 = scalar_lea.vmem %s0, 96
    %v637 = vld [vmem:[%s636] sm:$0xff]
    %v638 = vld [vmem:[%s636 + $0x8] sm:$0xff]
    %v639 = vpack.c.bf16 %v635, %v634
    %641 = vrot.lane.b32.xlu0 %v639, 32
    %v642 = vpop.permute.xlu0 %641
    %v644 = vsel %vm42, %v642, 0
    %646 = vmatpush.bf16.msra.mxu0 0
    %647 = vmatpush.bf16.msra.mxu0 0
    %648 = vmatpush.bf16.msra.mxu0 0
    %649 = vmatpush.bf16.msra.mxu0 0
    %650 = vmatpush.bf16.msra.mxu0 0
    %651 = vmatpush.bf16.msra.mxu0 0
    %652 = vmatpush.bf16.msra.mxu0 %v32
    %653 = vmatpush.bf16.msra.mxu0 %v31
    %654 = vmatmul.bf16.gmra.mxu0 %v644
    %v655 = vpop.f32.mrf.mxu0
    %v656 = vadd.f32 0.0, %v655
    %v657 = vpop.f32.mrf.mxu0
    %v658 = vadd.f32 0.0, %v657
    %659 = vdwg.mxu0
    %v660 = vadd.f32 %v637, %v656
    %v661 = vadd.f32 %v638, %v658
    %v662 = vxor.u32 %v660, 2147483648
    %v663 = vxor.u32 %v661, 2147483648
    %v664 = vmul.f32 %v662, 1.442695
    %v665 = vpow.pop %v664
    %v666 = vmul.f32 %v663, 1.442695
    %v667 = vpow.pop %v666
    %v668 = vadd.f32 %v665, 1.0
    %v669 = vadd.f32 %v667, 1.0
    %v670 = vrcp.pop %v668
    %v671 = vmul.f32 %v668, %v670
    %v672 = vsub.f32 1.0, %v671
    %v673 = vmul.f32 %v670, %v672
    %v674 = vadd.f32 %v670, %v673
    %vm675 = vweird.f32 %v668
    %vm676 = vweird.f32 %v670
    %vm677 = vmor %vm675, %vm676
    %v678 = vsel %vm677, %v670, %v674
    %v679 = vand.u32 2147483647, %v668
    %vm680 = vcmp.eq.f32.partialorder %v679, 8.507059e+37
    %v681 = vand.u32 %v668, 2147483648
    %v682 = vor.u32 1.1754944e-38, %v681
    %v683 = vsel %vm680, %v682, %v678
    %v684 = vmul.f32 1.0, %v683
    %v685 = vrcp.pop %v669
    %v686 = vmul.f32 %v669, %v685
    %v687 = vsub.f32 1.0, %v686
    %v688 = vmul.f32 %v685, %v687
    %v689 = vadd.f32 %v685, %v688
    %vm690 = vweird.f32 %v669
    %vm691 = vweird.f32 %v685
    %vm692 = vmor %vm690, %vm691
    %v693 = vsel %vm692, %v685, %v689
    %v694 = vand.u32 2147483647, %v669
    %vm695 = vcmp.eq.f32.partialorder %v694, 8.507059e+37
    %v696 = vand.u32 %v669, 2147483648
    %v697 = vor.u32 1.1754944e-38, %v696
    %v698 = vsel %vm695, %v697, %v693
    %v699 = vmul.f32 1.0, %v698
    %v700 = vtanh.pop %v660
    %v701 = vtanh.pop %v661
    %v702 = vmul.f32 %v684, %v622
    %v703 = vmul.f32 %v699, %v623
    %706 = vrot.lane.b32.xlu0 %v700, 64
    %v707 = vpop.permute.xlu0 %706
    %708 = vrot.lane.b32.xlu0 %v701, 64
    %v709 = vpop.permute.xlu0 %708
    %v712 = vmul.f32 %v684, %v707
    %v713 = vmul.f32 %v699, %v709
    %716 = vrot.lane.b32.xlu0 %v712, 32
    %v717 = vpop.permute.xlu0 %716
    %718 = vrot.lane.b32.xlu0 %v713, 32
    %v719 = vpop.permute.xlu0 %718
    %v722 = vadd.f32 %v702, %v717
    %v723 = vadd.f32 %v703, %v719
    %v724 = vtanh.pop %v722
    %v725 = vtanh.pop %v723
    %728 = vrot.lane.b32.xlu0 %v724, 64
    %v729 = vpop.permute.xlu0 %728
    %730 = vrot.lane.b32.xlu0 %v725, 64
    %v731 = vpop.permute.xlu0 %730
    %v734 = vmul.f32 %v684, %v729
    %v735 = vmul.f32 %v699, %v731
    %s736 = scalar_lea.vmem %s0, 112
    %v737 = vld [vmem:[%s736] sm:$0xff]
    %v738 = vld [vmem:[%s736 + $0x8] sm:$0xff]
    %v739 = vpack.c.bf16 %v735, %v734
    %741 = vrot.lane.b32.xlu0 %v739, 32
    %v742 = vpop.permute.xlu0 %741
    %v744 = vsel %vm42, %v742, 0
    %746 = vmatpush.bf16.msra.mxu0 0
    %747 = vmatpush.bf16.msra.mxu0 0
    %748 = vmatpush.bf16.msra.mxu0 0
    %749 = vmatpush.bf16.msra.mxu0 0
    %750 = vmatpush.bf16.msra.mxu0 0
    %751 = vmatpush.bf16.msra.mxu0 0
    %752 = vmatpush.bf16.msra.mxu0 %v32
    %753 = vmatpush.bf16.msra.mxu0 %v31
    %754 = vmatmul.bf16.gmra.mxu0 %v744
    %v755 = vpop.f32.mrf.mxu0
    %v756 = vadd.f32 0.0, %v755
    %v757 = vpop.f32.mrf.mxu0
    %v758 = vadd.f32 0.0, %v757
    %759 = vdwg.mxu0
    %v760 = vadd.f32 %v737, %v756
    %v761 = vadd.f32 %v738, %v758
    %v762 = vxor.u32 %v760, 2147483648
    %v763 = vxor.u32 %v761, 2147483648
    %v764 = vmul.f32 %v762, 1.442695
    %v765 = vpow.pop %v764
    %v766 = vmul.f32 %v763, 1.442695
    %v767 = vpow.pop %v766
    %v768 = vadd.f32 %v765, 1.0
    %v769 = vadd.f32 %v767, 1.0
    %v770 = vrcp.pop %v768
    %v771 = vmul.f32 %v768, %v770
    %v772 = vsub.f32 1.0, %v771
    %v773 = vmul.f32 %v770, %v772
    %v774 = vadd.f32 %v770, %v773
    %vm775 = vweird.f32 %v768
    %vm776 = vweird.f32 %v770
    %vm777 = vmor %vm775, %vm776
    %v778 = vsel %vm777, %v770, %v774
    %v779 = vand.u32 2147483647, %v768
    %vm780 = vcmp.eq.f32.partialorder %v779, 8.507059e+37
    %v781 = vand.u32 %v768, 2147483648
    %v782 = vor.u32 1.1754944e-38, %v781
    %v783 = vsel %vm780, %v782, %v778
    %v784 = vmul.f32 1.0, %v783
    %v785 = vrcp.pop %v769
    %v786 = vmul.f32 %v769, %v785
    %v787 = vsub.f32 1.0, %v786
    %v788 = vmul.f32 %v785, %v787
    %v789 = vadd.f32 %v785, %v788
    %vm790 = vweird.f32 %v769
    %vm791 = vweird.f32 %v785
    %vm792 = vmor %vm790, %vm791
    %v793 = vsel %vm792, %v785, %v789
    %v794 = vand.u32 2147483647, %v769
    %vm795 = vcmp.eq.f32.partialorder %v794, 8.507059e+37
    %v796 = vand.u32 %v769, 2147483648
    %v797 = vor.u32 1.1754944e-38, %v796
    %v798 = vsel %vm795, %v797, %v793
    %v799 = vmul.f32 1.0, %v798
    %v800 = vtanh.pop %v760
    %v801 = vtanh.pop %v761
    %v802 = vmul.f32 %v784, %v722
    %v803 = vmul.f32 %v799, %v723
    %806 = vrot.lane.b32.xlu0 %v800, 64
    %v807 = vpop.permute.xlu0 %806
    %808 = vrot.lane.b32.xlu0 %v801, 64
    %v809 = vpop.permute.xlu0 %808
    %v812 = vmul.f32 %v784, %v807
    %v813 = vmul.f32 %v799, %v809
    %816 = vrot.lane.b32.xlu0 %v812, 32
    %v817 = vpop.permute.xlu0 %816
    %818 = vrot.lane.b32.xlu0 %v813, 32
    %v819 = vpop.permute.xlu0 %818
    %v822 = vadd.f32 %v802, %v817
    %v823 = vadd.f32 %v803, %v819
    %v824 = vtanh.pop %v822
    %v825 = vtanh.pop %v823
    %828 = vrot.lane.b32.xlu0 %v824, 64
    %v829 = vpop.permute.xlu0 %828
    %830 = vrot.lane.b32.xlu0 %v825, 64
    %v831 = vpop.permute.xlu0 %830
    %v834 = vmul.f32 %v784, %v829
    %v835 = vmul.f32 %v799, %v831
    %838 = vrot.lane.b32.xlu0 %v834, 32
    %v839 = vpop.permute.xlu0 %838
    %840 = vrot.lane.b32.xlu0 %v835, 32
    %v841 = vpop.permute.xlu0 %840
    %844 = vst.msk [vmem:[#allocation3] sm:$0xff] %vm42, %v839
    %845 = vst.msk [vmem:[#allocation3 + $0x8] sm:$0xff] %vm42, %v841
    %v846 = vld [vmem:[%s736] sm:$0xff]
    %v847 = vld [vmem:[%s736 + $0x8] sm:$0xff]
    %v848 = vpack.c.bf16 %v835, %v834
    %850 = vrot.lane.b32.xlu0 %v848, 32
    %v851 = vpop.permute.xlu0 %850
    %v853 = vsel %vm42, %v851, 0
    %855 = vmatpush.bf16.msra.mxu0 0
    %856 = vmatpush.bf16.msra.mxu0 0
    %857 = vmatpush.bf16.msra.mxu0 0
    %858 = vmatpush.bf16.msra.mxu0 0
    %859 = vmatpush.bf16.msra.mxu0 0
    %860 = vmatpush.bf16.msra.mxu0 0
    %861 = vmatpush.bf16.msra.mxu0 %v32
    %862 = vmatpush.bf16.msra.mxu0 %v31
    %863 = vmatmul.bf16.gmra.mxu0 %v853
    %v864 = vpop.f32.mrf.mxu0
    %v865 = vadd.f32 0.0, %v864
    %v866 = vpop.f32.mrf.mxu0
    %v867 = vadd.f32 0.0, %v866
    %868 = vdwg.mxu0
    %v869 = vadd.f32 %v846, %v865
    %v870 = vadd.f32 %v847, %v867
    %v871 = vxor.u32 %v869, 2147483648
    %v872 = vxor.u32 %v870, 2147483648
    %v873 = vmul.f32 %v871, 1.442695
    %v874 = vpow.pop %v873
    %v875 = vmul.f32 %v872, 1.442695
    %v876 = vpow.pop %v875
    %v877 = vadd.f32 %v874, 1.0
    %v878 = vadd.f32 %v876, 1.0
    %v879 = vrcp.pop %v877
    %v880 = vmul.f32 %v877, %v879
    %v881 = vsub.f32 1.0, %v880
    %v882 = vmul.f32 %v879, %v881
    %v883 = vadd.f32 %v879, %v882
    %vm884 = vweird.f32 %v877
    %vm885 = vweird.f32 %v879
    %vm886 = vmor %vm884, %vm885
    %v887 = vsel %vm886, %v879, %v883
    %v888 = vand.u32 2147483647, %v877
    %vm889 = vcmp.eq.f32.partialorder %v888, 8.507059e+37
    %v890 = vand.u32 %v877, 2147483648
    %v891 = vor.u32 1.1754944e-38, %v890
    %v892 = vsel %vm889, %v891, %v887
    %v893 = vmul.f32 1.0, %v892
    %v894 = vrcp.pop %v878
    %v895 = vmul.f32 %v878, %v894
    %v896 = vsub.f32 1.0, %v895
    %v897 = vmul.f32 %v894, %v896
    %v898 = vadd.f32 %v894, %v897
    %vm899 = vweird.f32 %v878
    %vm900 = vweird.f32 %v894
    %vm901 = vmor %vm899, %vm900
    %v902 = vsel %vm901, %v894, %v898
    %v903 = vand.u32 2147483647, %v878
    %vm904 = vcmp.eq.f32.partialorder %v903, 8.507059e+37
    %v905 = vand.u32 %v878, 2147483648
    %v906 = vor.u32 1.1754944e-38, %v905
    %v907 = vsel %vm904, %v906, %v902
    %v908 = vmul.f32 1.0, %v907
    %v909 = vtanh.pop %v869
    %v910 = vtanh.pop %v870
    %v911 = vmul.f32 %v893, %v822
    %v912 = vmul.f32 %v908, %v823
    %915 = vrot.lane.b32.xlu0 %v909, 64
    %v916 = vpop.permute.xlu0 %915
    %917 = vrot.lane.b32.xlu0 %v910, 64
    %v918 = vpop.permute.xlu0 %917
    %v921 = vmul.f32 %v893, %v916
    %v922 = vmul.f32 %v908, %v918
    %925 = vrot.lane.b32.xlu0 %v921, 32
    %v926 = vpop.permute.xlu0 %925
    %927 = vrot.lane.b32.xlu0 %v922, 32
    %v928 = vpop.permute.xlu0 %927
    %v931 = vadd.f32 %v911, %v926
    %v932 = vadd.f32 %v912, %v928
    %v933 = vtanh.pop %v931
    %v934 = vtanh.pop %v932
    %937 = vrot.lane.b32.xlu0 %v933, 64
    %v938 = vpop.permute.xlu0 %937
    %939 = vrot.lane.b32.xlu0 %v934, 64
    %v940 = vpop.permute.xlu0 %939
    %v943 = vmul.f32 %v893, %v938
    %v944 = vmul.f32 %v908, %v940
    %947 = vrot.lane.b32.xlu0 %v943, 32
    %v948 = vpop.permute.xlu0 %947
    %949 = vrot.lane.b32.xlu0 %v944, 32
    %v950 = vpop.permute.xlu0 %949
    %953 = vst.msk [vmem:[#allocation2] sm:$0xff] %vm42, %v948
    %954 = vst.msk [vmem:[#allocation2 + $0x8] sm:$0xff] %vm42, %v950
    %v955 = vpack.c.bf16 %v944, %v943
    %957 = vrot.lane.b32.xlu0 %v955, 32
    %v958 = vpop.permute.xlu0 %957
    %v960 = vsel %vm42, %v958, 0
    %962 = vmatpush.bf16.msra.mxu0 0
    %963 = vmatpush.bf16.msra.mxu0 0
    %964 = vmatpush.bf16.msra.mxu0 0
    %965 = vmatpush.bf16.msra.mxu0 0
    %966 = vmatpush.bf16.msra.mxu0 0
    %967 = vmatpush.bf16.msra.mxu0 0
    %968 = vmatpush.bf16.msra.mxu0 %v38
    %969 = vmatpush.bf16.msra.mxu0 %v37
    %970 = vmatmul.bf16.gmra.mxu0 %v960
    %v971 = vpop.f32.mrf.mxu0
    %v972 = vadd.f32 0.0, %v971
    %v973 = vpop.f32.mrf.mxu0
    %v974 = vadd.f32 0.0, %v973
    %975 = vdwg.mxu0
    %v977 = vperm.slane %v39, 0
    %v979 = vadd.f32 %v977, %v972
    %v980 = vadd.f32 %v977, %v974
    %v981 = vxor.u32 %v979, 2147483648
    %v982 = vxor.u32 %v980, 2147483648
    %v983 = vmul.f32 %v981, 1.442695
    %v984 = vpow.pop %v983
    %v985 = vmul.f32 %v982, 1.442695
    %v986 = vpow.pop %v985
    %v987 = vadd.f32 %v984, 1.0
    %v988 = vadd.f32 %v986, 1.0
    %v989 = vrcp.pop %v987
    %v990 = vmul.f32 %v987, %v989
    %v991 = vsub.f32 1.0, %v990
    %v992 = vmul.f32 %v989, %v991
    %v993 = vadd.f32 %v989, %v992
    %vm994 = vweird.f32 %v987
    %vm995 = vweird.f32 %v989
    %vm996 = vmor %vm994, %vm995
    %v997 = vsel %vm996, %v989, %v993
    %v998 = vand.u32 2147483647, %v987
    %vm999 = vcmp.eq.f32.partialorder %v998, 8.507059e+37
    %v1000 = vand.u32 %v987, 2147483648
    %v1001 = vor.u32 1.1754944e-38, %v1000
    %v1002 = vsel %vm999, %v1001, %v997
    %v1003 = vmul.f32 1.0, %v1002
    %v1004 = vrcp.pop %v988
    %v1005 = vmul.f32 %v988, %v1004
    %v1006 = vsub.f32 1.0, %v1005
    %v1007 = vmul.f32 %v1004, %v1006
    %v1008 = vadd.f32 %v1004, %v1007
    %vm1009 = vweird.f32 %v988
    %vm1010 = vweird.f32 %v1004
    %vm1011 = vmor %vm1009, %vm1010
    %v1012 = vsel %vm1011, %v1004, %v1008
    %v1013 = vand.u32 2147483647, %v988
    %vm1014 = vcmp.eq.f32.partialorder %v1013, 8.507059e+37
    %v1015 = vand.u32 %v988, 2147483648
    %v1016 = vor.u32 1.1754944e-38, %v1015
    %v1017 = vsel %vm1014, %v1016, %v1012
    %v1018 = vmul.f32 1.0, %v1017
    %v1019 = vtanh.pop %v979
    %v1020 = vtanh.pop %v980
    %v1021 = vmul.f32 %v1003, %v931
    %v1022 = vmul.f32 %v1018, %v932
    %1025 = vrot.lane.b32.xlu0 %v1019, 64
    %v1026 = vpop.permute.xlu0 %1025
    %1027 = vrot.lane.b32.xlu0 %v1020, 64
    %v1028 = vpop.permute.xlu0 %1027
    %v1031 = vmul.f32 %v1003, %v1026
    %v1032 = vmul.f32 %v1018, %v1028
    %1035 = vrot.lane.b32.xlu0 %v1031, 32
    %v1036 = vpop.permute.xlu0 %1035
    %1037 = vrot.lane.b32.xlu0 %v1032, 32
    %v1038 = vpop.permute.xlu0 %1037
    %v1041 = vadd.f32 %v1021, %v1036
    %v1042 = vadd.f32 %v1022, %v1038
    %v1043 = vtanh.pop %v1041
    %v1044 = vtanh.pop %v1042
    %1047 = vrot.lane.b32.xlu0 %v1043, 64
    %v1048 = vpop.permute.xlu0 %1047
    %1049 = vrot.lane.b32.xlu0 %v1044, 64
    %v1050 = vpop.permute.xlu0 %1049
    %v1053 = vmul.f32 %v1003, %v1048
    %v1054 = vmul.f32 %v1018, %v1050
    %1057 = vrot.lane.b32.xlu0 %v1053, 32
    %v1058 = vpop.permute.xlu0 %1057
    %1059 = vrot.lane.b32.xlu0 %v1054, 32
    %v1060 = vpop.permute.xlu0 %1059
    %1063 = vst.msk [vmem:[#allocation2 + $0x10] sm:$0xff] %vm42, %v1058
    %1064 = vst.msk [vmem:[#allocation2 + $0x18] sm:$0xff] %vm42, %v1060
    %v1065 = vpack.c.bf16 %v1054, %v1053
    %1067 = vrot.lane.b32.xlu0 %v1065, 32
    %v1068 = vpop.permute.xlu0 %1067
    %v1070 = vsel %vm42, %v1068, 0
    %1072 = vmatpush.bf16.msra.mxu0 0
    %1073 = vmatpush.bf16.msra.mxu0 0
    %1074 = vmatpush.bf16.msra.mxu0 0
    %1075 = vmatpush.bf16.msra.mxu0 0
    %1076 = vmatpush.bf16.msra.mxu0 0
    %1077 = vmatpush.bf16.msra.mxu0 0
    %1078 = vmatpush.bf16.msra.mxu0 %v38
    %1079 = vmatpush.bf16.msra.mxu0 %v37
    %1080 = vmatmul.bf16.gmra.mxu0 %v1070
    %v1081 = vpop.f32.mrf.mxu0
    %v1082 = vadd.f32 0.0, %v1081
    %v1083 = vpop.f32.mrf.mxu0
    %v1084 = vadd.f32 0.0, %v1083
    %1085 = vdwg.mxu0
    %v1086 = vadd.f32 %v977, %v1082
    %v1087 = vadd.f32 %v977, %v1084
    %v1088 = vxor.u32 %v1086, 2147483648
    %v1089 = vxor.u32 %v1087, 2147483648
    %v1090 = vmul.f32 %v1088, 1.442695
    %v1091 = vpow.pop %v1090
    %v1092 = vmul.f32 %v1089, 1.442695
    %v1093 = vpow.pop %v1092
    %v1094 = vadd.f32 %v1091, 1.0
    %v1095 = vadd.f32 %v1093, 1.0
    %v1096 = vrcp.pop %v1094
    %v1097 = vmul.f32 %v1094, %v1096
    %v1098 = vsub.f32 1.0, %v1097
    %v1099 = vmul.f32 %v1096, %v1098
    %v1100 = vadd.f32 %v1096, %v1099
    %vm1101 = vweird.f32 %v1094
    %vm1102 = vweird.f32 %v1096
    %vm1103 = vmor %vm1101, %vm1102
    %v1104 = vsel %vm1103, %v1096, %v1100
    %v1105 = vand.u32 2147483647, %v1094
    %vm1106 = vcmp.eq.f32.partialorder %v1105, 8.507059e+37
    %v1107 = vand.u32 %v1094, 2147483648
    %v1108 = vor.u32 1.1754944e-38, %v1107
    %v1109 = vsel %vm1106, %v1108, %v1104
    %v1110 = vmul.f32 1.0, %v1109
    %v1111 = vrcp.pop %v1095
    %v1112 = vmul.f32 %v1095, %v1111
    %v1113 = vsub.f32 1.0, %v1112
    %v1114 = vmul.f32 %v1111, %v1113
    %v1115 = vadd.f32 %v1111, %v1114
    %vm1116 = vweird.f32 %v1095
    %vm1117 = vweird.f32 %v1111
    %vm1118 = vmor %vm1116, %vm1117
    %v1119 = vsel %vm1118, %v1111, %v1115
    %v1120 = vand.u32 2147483647, %v1095
    %vm1121 = vcmp.eq.f32.partialorder %v1120, 8.507059e+37
    %v1122 = vand.u32 %v1095, 2147483648
    %v1123 = vor.u32 1.1754944e-38, %v1122
    %v1124 = vsel %vm1121, %v1123, %v1119
    %v1125 = vmul.f32 1.0, %v1124
    %v1126 = vtanh.pop %v1086
    %v1127 = vtanh.pop %v1087
    %v1128 = vmul.f32 %v1110, %v1041
    %v1129 = vmul.f32 %v1125, %v1042
    %1132 = vrot.lane.b32.xlu0 %v1126, 64
    %v1133 = vpop.permute.xlu0 %1132
    %1134 = vrot.lane.b32.xlu0 %v1127, 64
    %v1135 = vpop.permute.xlu0 %1134
    %v1138 = vmul.f32 %v1110, %v1133
    %v1139 = vmul.f32 %v1125, %v1135
    %1142 = vrot.lane.b32.xlu0 %v1138, 32
    %v1143 = vpop.permute.xlu0 %1142
    %1144 = vrot.lane.b32.xlu0 %v1139, 32
    %v1145 = vpop.permute.xlu0 %1144
    %v1148 = vadd.f32 %v1128, %v1143
    %v1149 = vadd.f32 %v1129, %v1145
    %v1150 = vtanh.pop %v1148
    %v1151 = vtanh.pop %v1149
    %1154 = vrot.lane.b32.xlu0 %v1150, 64
    %v1155 = vpop.permute.xlu0 %1154
    %1156 = vrot.lane.b32.xlu0 %v1151, 64
    %v1157 = vpop.permute.xlu0 %1156
    %v1160 = vmul.f32 %v1110, %v1155
    %v1161 = vmul.f32 %v1125, %v1157
    %1164 = vrot.lane.b32.xlu0 %v1160, 32
    %v1165 = vpop.permute.xlu0 %1164
    %1166 = vrot.lane.b32.xlu0 %v1161, 32
    %v1167 = vpop.permute.xlu0 %1166
    %1170 = vst.msk [vmem:[#allocation2 + $0x20] sm:$0xff] %vm42, %v1165
    %1171 = vst.msk [vmem:[#allocation2 + $0x28] sm:$0xff] %vm42, %v1167
    %v1172 = vpack.c.bf16 %v1161, %v1160
    %1174 = vrot.lane.b32.xlu0 %v1172, 32
    %v1175 = vpop.permute.xlu0 %1174
    %v1177 = vsel %vm42, %v1175, 0
    %1179 = vmatpush.bf16.msra.mxu0 0
    %1180 = vmatpush.bf16.msra.mxu0 0
    %1181 = vmatpush.bf16.msra.mxu0 0
    %1182 = vmatpush.bf16.msra.mxu0 0
    %1183 = vmatpush.bf16.msra.mxu0 0
    %1184 = vmatpush.bf16.msra.mxu0 0
    %1185 = vmatpush.bf16.msra.mxu0 %v38
    %1186 = vmatpush.bf16.msra.mxu0 %v37
    %1187 = vmatmul.bf16.gmra.mxu0 %v1177
    %v1188 = vpop.f32.mrf.mxu0
    %v1189 = vadd.f32 0.0, %v1188
    %v1190 = vpop.f32.mrf.mxu0
    %v1191 = vadd.f32 0.0, %v1190
    %1192 = vdwg.mxu0
    %v1193 = vadd.f32 %v977, %v1189
    %v1194 = vadd.f32 %v977, %v1191
    %v1195 = vxor.u32 %v1193, 2147483648
    %v1196 = vxor.u32 %v1194, 2147483648
    %v1197 = vmul.f32 %v1195, 1.442695
    %v1198 = vpow.pop %v1197
    %v1199 = vmul.f32 %v1196, 1.442695
    %v1200 = vpow.pop %v1199
    %v1201 = vadd.f32 %v1198, 1.0
    %v1202 = vadd.f32 %v1200, 1.0
    %v1203 = vrcp.pop %v1201
    %v1204 = vmul.f32 %v1201, %v1203
    %v1205 = vsub.f32 1.0, %v1204
    %v1206 = vmul.f32 %v1203, %v1205
    %v1207 = vadd.f32 %v1203, %v1206
    %vm1208 = vweird.f32 %v1201
    %vm1209 = vweird.f32 %v1203
    %vm1210 = vmor %vm1208, %vm1209
    %v1211 = vsel %vm1210, %v1203, %v1207
    %v1212 = vand.u32 2147483647, %v1201
    %vm1213 = vcmp.eq.f32.partialorder %v1212, 8.507059e+37
    %v1214 = vand.u32 %v1201, 2147483648
    %v1215 = vor.u32 1.1754944e-38, %v1214
    %v1216 = vsel %vm1213, %v1215, %v1211
    %v1217 = vmul.f32 1.0, %v1216
    %v1218 = vrcp.pop %v1202
    %v1219 = vmul.f32 %v1202, %v1218
    %v1220 = vsub.f32 1.0, %v1219
    %v1221 = vmul.f32 %v1218, %v1220
    %v1222 = vadd.f32 %v1218, %v1221
    %vm1223 = vweird.f32 %v1202
    %vm1224 = vweird.f32 %v1218
    %vm1225 = vmor %vm1223, %vm1224
    %v1226 = vsel %vm1225, %v1218, %v1222
    %v1227 = vand.u32 2147483647, %v1202
    %vm1228 = vcmp.eq.f32.partialorder %v1227, 8.507059e+37
    %v1229 = vand.u32 %v1202, 2147483648
    %v1230 = vor.u32 1.1754944e-38, %v1229
    %v1231 = vsel %vm1228, %v1230, %v1226
    %v1232 = vmul.f32 1.0, %v1231
    %v1233 = vtanh.pop %v1193
    %v1234 = vtanh.pop %v1194
    %v1235 = vmul.f32 %v1217, %v1148
    %v1236 = vmul.f32 %v1232, %v1149
    %1239 = vrot.lane.b32.xlu0 %v1233, 64
    %v1240 = vpop.permute.xlu0 %1239
    %1241 = vrot.lane.b32.xlu0 %v1234, 64
    %v1242 = vpop.permute.xlu0 %1241
    %v1245 = vmul.f32 %v1217, %v1240
    %v1246 = vmul.f32 %v1232, %v1242
    %1249 = vrot.lane.b32.xlu0 %v1245, 32
    %v1250 = vpop.permute.xlu0 %1249
    %1251 = vrot.lane.b32.xlu0 %v1246, 32
    %v1252 = vpop.permute.xlu0 %1251
    %v1255 = vadd.f32 %v1235, %v1250
    %v1256 = vadd.f32 %v1236, %v1252
    %v1257 = vtanh.pop %v1255
    %v1258 = vtanh.pop %v1256
    %1261 = vrot.lane.b32.xlu0 %v1257, 64
    %v1262 = vpop.permute.xlu0 %1261
    %1263 = vrot.lane.b32.xlu0 %v1258, 64
    %v1264 = vpop.permute.xlu0 %1263
    %v1267 = vmul.f32 %v1217, %v1262
    %v1268 = vmul.f32 %v1232, %v1264
    %1271 = vrot.lane.b32.xlu0 %v1267, 32
    %v1272 = vpop.permute.xlu0 %1271
    %1273 = vrot.lane.b32.xlu0 %v1268, 32
    %v1274 = vpop.permute.xlu0 %1273
    %1277 = vst.msk [vmem:[#allocation2 + $0x30] sm:$0xff] %vm42, %v1272
    %1278 = vst.msk [vmem:[#allocation2 + $0x38] sm:$0xff] %vm42, %v1274
    %v1279 = vpack.c.bf16 %v1268, %v1267
    %1281 = vrot.lane.b32.xlu0 %v1279, 32
    %v1282 = vpop.permute.xlu0 %1281
    %v1284 = vsel %vm42, %v1282, 0
    %1286 = vmatpush.bf16.msra.mxu0 0
    %1287 = vmatpush.bf16.msra.mxu0 0
    %1288 = vmatpush.bf16.msra.mxu0 0
    %1289 = vmatpush.bf16.msra.mxu0 0
    %1290 = vmatpush.bf16.msra.mxu0 0
    %1291 = vmatpush.bf16.msra.mxu0 0
    %1292 = vmatpush.bf16.msra.mxu0 %v38
    %1293 = vmatpush.bf16.msra.mxu0 %v37
    %1294 = vmatmul.bf16.gmra.mxu0 %v1284
    %v1295 = vpop.f32.mrf.mxu0
    %v1296 = vadd.f32 0.0, %v1295
    %v1297 = vpop.f32.mrf.mxu0
    %v1298 = vadd.f32 0.0, %v1297
    %1299 = vdwg.mxu0
    %v1300 = vadd.f32 %v977, %v1296
    %v1301 = vadd.f32 %v977, %v1298
    %v1302 = vxor.u32 %v1300, 2147483648
    %v1303 = vxor.u32 %v1301, 2147483648
    %v1304 = vmul.f32 %v1302, 1.442695
    %v1305 = vpow.pop %v1304
    %v1306 = vmul.f32 %v1303, 1.442695
    %v1307 = vpow.pop %v1306
    %v1308 = vadd.f32 %v1305, 1.0
    %v1309 = vadd.f32 %v1307, 1.0
    %v1310 = vrcp.pop %v1308
    %v1311 = vmul.f32 %v1308, %v1310
    %v1312 = vsub.f32 1.0, %v1311
    %v1313 = vmul.f32 %v1310, %v1312
    %v1314 = vadd.f32 %v1310, %v1313
    %vm1315 = vweird.f32 %v1308
    %vm1316 = vweird.f32 %v1310
    %vm1317 = vmor %vm1315, %vm1316
    %v1318 = vsel %vm1317, %v1310, %v1314
    %v1319 = vand.u32 2147483647, %v1308
    %vm1320 = vcmp.eq.f32.partialorder %v1319, 8.507059e+37
    %v1321 = vand.u32 %v1308, 2147483648
    %v1322 = vor.u32 1.1754944e-38, %v1321
    %v1323 = vsel %vm1320, %v1322, %v1318
    %v1324 = vmul.f32 1.0, %v1323
    %v1325 = vrcp.pop %v1309
    %v1326 = vmul.f32 %v1309, %v1325
    %v1327 = vsub.f32 1.0, %v1326
    %v1328 = vmul.f32 %v1325, %v1327
    %v1329 = vadd.f32 %v1325, %v1328
    %vm1330 = vweird.f32 %v1309
    %vm1331 = vweird.f32 %v1325
    %vm1332 = vmor %vm1330, %vm1331
    %v1333 = vsel %vm1332, %v1325, %v1329
    %v1334 = vand.u32 2147483647, %v1309
    %vm1335 = vcmp.eq.f32.partialorder %v1334, 8.507059e+37
    %v1336 = vand.u32 %v1309, 2147483648
    %v1337 = vor.u32 1.1754944e-38, %v1336
    %v1338 = vsel %vm1335, %v1337, %v1333
    %v1339 = vmul.f32 1.0, %v1338
    %v1340 = vtanh.pop %v1300
    %v1341 = vtanh.pop %v1301
    %v1342 = vmul.f32 %v1324, %v1255
    %v1343 = vmul.f32 %v1339, %v1256
    %1346 = vrot.lane.b32.xlu0 %v1340, 64
    %v1347 = vpop.permute.xlu0 %1346
    %1348 = vrot.lane.b32.xlu0 %v1341, 64
    %v1349 = vpop.permute.xlu0 %1348
    %v1352 = vmul.f32 %v1324, %v1347
    %v1353 = vmul.f32 %v1339, %v1349
    %1356 = vrot.lane.b32.xlu0 %v1352, 32
    %v1357 = vpop.permute.xlu0 %1356
    %1358 = vrot.lane.b32.xlu0 %v1353, 32
    %v1359 = vpop.permute.xlu0 %1358
    %v1362 = vadd.f32 %v1342, %v1357
    %v1363 = vadd.f32 %v1343, %v1359
    %v1364 = vtanh.pop %v1362
    %v1365 = vtanh.pop %v1363
    %1368 = vrot.lane.b32.xlu0 %v1364, 64
    %v1369 = vpop.permute.xlu0 %1368
    %1370 = vrot.lane.b32.xlu0 %v1365, 64
    %v1371 = vpop.permute.xlu0 %1370
    %v1374 = vmul.f32 %v1324, %v1369
    %v1375 = vmul.f32 %v1339, %v1371
    %1378 = vrot.lane.b32.xlu0 %v1374, 32
    %v1379 = vpop.permute.xlu0 %1378
    %1380 = vrot.lane.b32.xlu0 %v1375, 32
    %v1381 = vpop.permute.xlu0 %1380
    %1384 = vst.msk [vmem:[#allocation2 + $0x40] sm:$0xff] %vm42, %v1379
    %1385 = vst.msk [vmem:[#allocation2 + $0x48] sm:$0xff] %vm42, %v1381
    %v1386 = vpack.c.bf16 %v1375, %v1374
    %1388 = vrot.lane.b32.xlu0 %v1386, 32
    %v1389 = vpop.permute.xlu0 %1388
    %v1391 = vsel %vm42, %v1389, 0
    %1393 = vmatpush.bf16.msra.mxu0 0
    %1394 = vmatpush.bf16.msra.mxu0 0
    %1395 = vmatpush.bf16.msra.mxu0 0
    %1396 = vmatpush.bf16.msra.mxu0 0
    %1397 = vmatpush.bf16.msra.mxu0 0
    %1398 = vmatpush.bf16.msra.mxu0 0
    %1399 = vmatpush.bf16.msra.mxu0 %v38
    %1400 = vmatpush.bf16.msra.mxu0 %v37
    %1401 = vmatmul.bf16.gmra.mxu0 %v1391
    %v1402 = vpop.f32.mrf.mxu0
    %v1403 = vadd.f32 0.0, %v1402
    %v1404 = vpop.f32.mrf.mxu0
    %v1405 = vadd.f32 0.0, %v1404
    %1406 = vdwg.mxu0
    %v1407 = vadd.f32 %v977, %v1403
    %v1408 = vadd.f32 %v977, %v1405
    %v1409 = vxor.u32 %v1407, 2147483648
    %v1410 = vxor.u32 %v1408, 2147483648
    %v1411 = vmul.f32 %v1409, 1.442695
    %v1412 = vpow.pop %v1411
    %v1413 = vmul.f32 %v1410, 1.442695
    %v1414 = vpow.pop %v1413
    %v1415 = vadd.f32 %v1412, 1.0
    %v1416 = vadd.f32 %v1414, 1.0
    %v1417 = vrcp.pop %v1415
    %v1418 = vmul.f32 %v1415, %v1417
    %v1419 = vsub.f32 1.0, %v1418
    %v1420 = vmul.f32 %v1417, %v1419
    %v1421 = vadd.f32 %v1417, %v1420
    %vm1422 = vweird.f32 %v1415
    %vm1423 = vweird.f32 %v1417
    %vm1424 = vmor %vm1422, %vm1423
    %v1425 = vsel %vm1424, %v1417, %v1421
    %v1426 = vand.u32 2147483647, %v1415
    %vm1427 = vcmp.eq.f32.partialorder %v1426, 8.507059e+37
    %v1428 = vand.u32 %v1415, 2147483648
    %v1429 = vor.u32 1.1754944e-38, %v1428
    %v1430 = vsel %vm1427, %v1429, %v1425
    %v1431 = vmul.f32 1.0, %v1430
    %v1432 = vrcp.pop %v1416
    %v1433 = vmul.f32 %v1416, %v1432
    %v1434 = vsub.f32 1.0, %v1433
    %v1435 = vmul.f32 %v1432, %v1434
    %v1436 = vadd.f32 %v1432, %v1435
    %vm1437 = vweird.f32 %v1416
    %vm1438 = vweird.f32 %v1432
    %vm1439 = vmor %vm1437, %vm1438
    %v1440 = vsel %vm1439, %v1432, %v1436
    %v1441 = vand.u32 2147483647, %v1416
    %vm1442 = vcmp.eq.f32.partialorder %v1441, 8.507059e+37
    %v1443 = vand.u32 %v1416, 2147483648
    %v1444 = vor.u32 1.1754944e-38, %v1443
    %v1445 = vsel %vm1442, %v1444, %v1440
    %v1446 = vmul.f32 1.0, %v1445
    %v1447 = vtanh.pop %v1407
    %v1448 = vtanh.pop %v1408
    %v1449 = vmul.f32 %v1431, %v1362
    %v1450 = vmul.f32 %v1446, %v1363
    %1453 = vrot.lane.b32.xlu0 %v1447, 64
    %v1454 = vpop.permute.xlu0 %1453
    %1455 = vrot.lane.b32.xlu0 %v1448, 64
    %v1456 = vpop.permute.xlu0 %1455
    %v1459 = vmul.f32 %v1431, %v1454
    %v1460 = vmul.f32 %v1446, %v1456
    %1463 = vrot.lane.b32.xlu0 %v1459, 32
    %v1464 = vpop.permute.xlu0 %1463
    %1465 = vrot.lane.b32.xlu0 %v1460, 32
    %v1466 = vpop.permute.xlu0 %1465
    %v1469 = vadd.f32 %v1449, %v1464
    %v1470 = vadd.f32 %v1450, %v1466
    %v1471 = vtanh.pop %v1469
    %v1472 = vtanh.pop %v1470
    %1475 = vrot.lane.b32.xlu0 %v1471, 64
    %v1476 = vpop.permute.xlu0 %1475
    %1477 = vrot.lane.b32.xlu0 %v1472, 64
    %v1478 = vpop.permute.xlu0 %1477
    %v1481 = vmul.f32 %v1431, %v1476
    %v1482 = vmul.f32 %v1446, %v1478
    %1485 = vrot.lane.b32.xlu0 %v1481, 32
    %v1486 = vpop.permute.xlu0 %1485
    %1487 = vrot.lane.b32.xlu0 %v1482, 32
    %v1488 = vpop.permute.xlu0 %1487
    %1491 = vst.msk [vmem:[#allocation2 + $0x50] sm:$0xff] %vm42, %v1486
    %1492 = vst.msk [vmem:[#allocation2 + $0x58] sm:$0xff] %vm42, %v1488
    %v1493 = vpack.c.bf16 %v1482, %v1481
    %1495 = vrot.lane.b32.xlu0 %v1493, 32
    %v1496 = vpop.permute.xlu0 %1495
    %v1498 = vsel %vm42, %v1496, 0
    %1500 = vmatpush.bf16.msra.mxu0 0
    %1501 = vmatpush.bf16.msra.mxu0 0
    %1502 = vmatpush.bf16.msra.mxu0 0
    %1503 = vmatpush.bf16.msra.mxu0 0
    %1504 = vmatpush.bf16.msra.mxu0 0
    %1505 = vmatpush.bf16.msra.mxu0 0
    %1506 = vmatpush.bf16.msra.mxu0 %v38
    %1507 = vmatpush.bf16.msra.mxu0 %v37
    %1508 = vmatmul.bf16.gmra.mxu0 %v1498
    %v1509 = vpop.f32.mrf.mxu0
    %v1510 = vadd.f32 0.0, %v1509
    %v1511 = vpop.f32.mrf.mxu0
    %v1512 = vadd.f32 0.0, %v1511
    %1513 = vdwg.mxu0
    %v1514 = vadd.f32 %v977, %v1510
    %v1515 = vadd.f32 %v977, %v1512
    %v1516 = vxor.u32 %v1514, 2147483648
    %v1517 = vxor.u32 %v1515, 2147483648
    %v1518 = vmul.f32 %v1516, 1.442695
    %v1519 = vpow.pop %v1518
    %v1520 = vmul.f32 %v1517, 1.442695
    %v1521 = vpow.pop %v1520
    %v1522 = vadd.f32 %v1519, 1.0
    %v1523 = vadd.f32 %v1521, 1.0
    %v1524 = vrcp.pop %v1522
    %v1525 = vmul.f32 %v1522, %v1524
    %v1526 = vsub.f32 1.0, %v1525
    %v1527 = vmul.f32 %v1524, %v1526
    %v1528 = vadd.f32 %v1524, %v1527
    %vm1529 = vweird.f32 %v1522
    %vm1530 = vweird.f32 %v1524
    %vm1531 = vmor %vm1529, %vm1530
    %v1532 = vsel %vm1531, %v1524, %v1528
    %v1533 = vand.u32 2147483647, %v1522
    %vm1534 = vcmp.eq.f32.partialorder %v1533, 8.507059e+37
    %v1535 = vand.u32 %v1522, 2147483648
    %v1536 = vor.u32 1.1754944e-38, %v1535
    %v1537 = vsel %vm1534, %v1536, %v1532
    %v1538 = vmul.f32 1.0, %v1537
    %v1539 = vrcp.pop %v1523
    %v1540 = vmul.f32 %v1523, %v1539
    %v1541 = vsub.f32 1.0, %v1540
    %v1542 = vmul.f32 %v1539, %v1541
    %v1543 = vadd.f32 %v1539, %v1542
    %vm1544 = vweird.f32 %v1523
    %vm1545 = vweird.f32 %v1539
    %vm1546 = vmor %vm1544, %vm1545
    %v1547 = vsel %vm1546, %v1539, %v1543
    %v1548 = vand.u32 2147483647, %v1523
    %vm1549 = vcmp.eq.f32.partialorder %v1548, 8.507059e+37
    %v1550 = vand.u32 %v1523, 2147483648
    %v1551 = vor.u32 1.1754944e-38, %v1550
    %v1552 = vsel %vm1549, %v1551, %v1547
    %v1553 = vmul.f32 1.0, %v1552
    %v1554 = vtanh.pop %v1514
    %v1555 = vtanh.pop %v1515
    %v1556 = vmul.f32 %v1538, %v1469
    %v1557 = vmul.f32 %v1553, %v1470
    %1560 = vrot.lane.b32.xlu0 %v1554, 64
    %v1561 = vpop.permute.xlu0 %1560
    %1562 = vrot.lane.b32.xlu0 %v1555, 64
    %v1563 = vpop.permute.xlu0 %1562
    %v1566 = vmul.f32 %v1538, %v1561
    %v1567 = vmul.f32 %v1553, %v1563
    %1570 = vrot.lane.b32.xlu0 %v1566, 32
    %v1571 = vpop.permute.xlu0 %1570
    %1572 = vrot.lane.b32.xlu0 %v1567, 32
    %v1573 = vpop.permute.xlu0 %1572
    %v1576 = vadd.f32 %v1556, %v1571
    %v1577 = vadd.f32 %v1557, %v1573
    %v1578 = vtanh.pop %v1576
    %v1579 = vtanh.pop %v1577
    %1582 = vrot.lane.b32.xlu0 %v1578, 64
    %v1583 = vpop.permute.xlu0 %1582
    %1584 = vrot.lane.b32.xlu0 %v1579, 64
    %v1585 = vpop.permute.xlu0 %1584
    %v1588 = vmul.f32 %v1538, %v1583
    %v1589 = vmul.f32 %v1553, %v1585
    %1592 = vrot.lane.b32.xlu0 %v1588, 32
    %v1593 = vpop.permute.xlu0 %1592
    %1594 = vrot.lane.b32.xlu0 %v1589, 32
    %v1595 = vpop.permute.xlu0 %1594
    %1598 = vst.msk [vmem:[#allocation2 + $0x60] sm:$0xff] %vm42, %v1593
    %1599 = vst.msk [vmem:[#allocation2 + $0x68] sm:$0xff] %vm42, %v1595
    %v1600 = vpack.c.bf16 %v1589, %v1588
    %1602 = vrot.lane.b32.xlu0 %v1600, 32
    %v1603 = vpop.permute.xlu0 %1602
    %v1605 = vsel %vm42, %v1603, 0
    %1607 = vmatpush.bf16.msra.mxu0 0
    %1608 = vmatpush.bf16.msra.mxu0 0
    %1609 = vmatpush.bf16.msra.mxu0 0
    %1610 = vmatpush.bf16.msra.mxu0 0
    %1611 = vmatpush.bf16.msra.mxu0 0
    %1612 = vmatpush.bf16.msra.mxu0 0
    %1613 = vmatpush.bf16.msra.mxu0 %v38
    %1614 = vmatpush.bf16.msra.mxu0 %v37
    %1615 = vmatmul.bf16.gmra.mxu0 %v1605
    %v1616 = vpop.f32.mrf.mxu0
    %v1617 = vadd.f32 0.0, %v1616
    %v1618 = vpop.f32.mrf.mxu0
    %v1619 = vadd.f32 0.0, %v1618
    %1620 = vdwg.mxu0
    %v1621 = vadd.f32 %v977, %v1617
    %v1622 = vadd.f32 %v977, %v1619
    %v1623 = vxor.u32 %v1621, 2147483648
    %v1624 = vxor.u32 %v1622, 2147483648
    %v1625 = vmul.f32 %v1623, 1.442695
    %v1626 = vpow.pop %v1625
    %v1627 = vmul.f32 %v1624, 1.442695
    %v1628 = vpow.pop %v1627
    %v1629 = vadd.f32 %v1626, 1.0
    %v1630 = vadd.f32 %v1628, 1.0
    %v1631 = vrcp.pop %v1629
    %v1632 = vmul.f32 %v1629, %v1631
    %v1633 = vsub.f32 1.0, %v1632
    %v1634 = vmul.f32 %v1631, %v1633
    %v1635 = vadd.f32 %v1631, %v1634
    %vm1636 = vweird.f32 %v1629
    %vm1637 = vweird.f32 %v1631
    %vm1638 = vmor %vm1636, %vm1637
    %v1639 = vsel %vm1638, %v1631, %v1635
    %v1640 = vand.u32 2147483647, %v1629
    %vm1641 = vcmp.eq.f32.partialorder %v1640, 8.507059e+37
    %v1642 = vand.u32 %v1629, 2147483648
    %v1643 = vor.u32 1.1754944e-38, %v1642
    %v1644 = vsel %vm1641, %v1643, %v1639
    %v1645 = vmul.f32 1.0, %v1644
    %v1646 = vrcp.pop %v1630
    %v1647 = vmul.f32 %v1630, %v1646
    %v1648 = vsub.f32 1.0, %v1647
    %v1649 = vmul.f32 %v1646, %v1648
    %v1650 = vadd.f32 %v1646, %v1649
    %vm1651 = vweird.f32 %v1630
    %vm1652 = vweird.f32 %v1646
    %vm1653 = vmor %vm1651, %vm1652
    %v1654 = vsel %vm1653, %v1646, %v1650
    %v1655 = vand.u32 2147483647, %v1630
    %vm1656 = vcmp.eq.f32.partialorder %v1655, 8.507059e+37
    %v1657 = vand.u32 %v1630, 2147483648
    %v1658 = vor.u32 1.1754944e-38, %v1657
    %v1659 = vsel %vm1656, %v1658, %v1654
    %v1660 = vmul.f32 1.0, %v1659
    %v1661 = vtanh.pop %v1621
    %v1662 = vtanh.pop %v1622
    %v1663 = vmul.f32 %v1645, %v1576
    %v1664 = vmul.f32 %v1660, %v1577
    %1667 = vrot.lane.b32.xlu0 %v1661, 64
    %v1668 = vpop.permute.xlu0 %1667
    %1669 = vrot.lane.b32.xlu0 %v1662, 64
    %v1670 = vpop.permute.xlu0 %1669
    %v1673 = vmul.f32 %v1645, %v1668
    %v1674 = vmul.f32 %v1660, %v1670
    %1677 = vrot.lane.b32.xlu0 %v1673, 32
    %v1678 = vpop.permute.xlu0 %1677
    %1679 = vrot.lane.b32.xlu0 %v1674, 32
    %v1680 = vpop.permute.xlu0 %1679
    %v1683 = vadd.f32 %v1663, %v1678
    %v1684 = vadd.f32 %v1664, %v1680
    %v1685 = vtanh.pop %v1683
    %v1686 = vtanh.pop %v1684
    %1689 = vrot.lane.b32.xlu0 %v1685, 64
    %v1690 = vpop.permute.xlu0 %1689
    %1691 = vrot.lane.b32.xlu0 %v1686, 64
    %v1692 = vpop.permute.xlu0 %1691
    %v1695 = vmul.f32 %v1645, %v1690
    %v1696 = vmul.f32 %v1660, %v1692
    %1699 = vrot.lane.b32.xlu0 %v1695, 32
    %v1700 = vpop.permute.xlu0 %1699
    %1701 = vrot.lane.b32.xlu0 %v1696, 32
    %v1702 = vpop.permute.xlu0 %1701
    %1705 = vst.msk [vmem:[#allocation2 + $0x70] sm:$0xff] %vm42, %v1700
    %1706 = vst.msk [vmem:[#allocation2 + $0x78] sm:$0xff] %vm42, %v1702
    %v1707 = vld [vmem:[#allocation2] sm:$0xff]
    %v1708 = vld [vmem:[#allocation2 + $0x8] sm:$0xff]
    %v1709 = vld [vmem:[#allocation2 + $0x10] sm:$0xff]
    %v1710 = vld [vmem:[#allocation2 + $0x18] sm:$0xff]
    %v1711 = vld [vmem:[#allocation2 + $0x20] sm:$0xff]
    %v1712 = vld [vmem:[#allocation2 + $0x28] sm:$0xff]
    %v1713 = vld [vmem:[#allocation2 + $0x30] sm:$0xff]
    %v1714 = vld [vmem:[#allocation2 + $0x38] sm:$0xff]
    %v1715 = vld [vmem:[#allocation2 + $0x40] sm:$0xff]
    %v1716 = vld [vmem:[#allocation2 + $0x48] sm:$0xff]
    %v1717 = vld [vmem:[#allocation2 + $0x50] sm:$0xff]
    %v1718 = vld [vmem:[#allocation2 + $0x58] sm:$0xff]
    %v1719 = vld [vmem:[#allocation2 + $0x60] sm:$0xff]
    %v1720 = vld [vmem:[#allocation2 + $0x68] sm:$0xff]
    %v1721 = vld [vmem:[#allocation2 + $0x70] sm:$0xff]
    %v1722 = vld [vmem:[#allocation2 + $0x78] sm:$0xff]
    %v1723 = vpack.c.bf16 %v1708, %v1707
    %v1724 = vpack.c.bf16 %v1710, %v1709
    %v1725 = vpack.c.bf16 %v1712, %v1711
    %v1726 = vpack.c.bf16 %v1714, %v1713
    %v1727 = vpack.c.bf16 %v1716, %v1715
    %v1728 = vpack.c.bf16 %v1718, %v1717
    %v1729 = vpack.c.bf16 %v1720, %v1719
    %v1730 = vpack.c.bf16 %v1722, %v1721
    %v1731 = vld [vmem:[%s4] sm:$0xff]
    %v1732 = vld [vmem:[%s4 + $0x8] sm:$0xff]
    %v1733 = vld [vmem:[%s4 + $0x10] sm:$0xff]
    %v1734 = vld [vmem:[%s4 + $0x18] sm:$0xff]
    %v1735 = vpack.c.bf16 %v1732, %v1731
    %v1736 = vpack.c.bf16 %v1734, %v1733
    %v1737 = vld [vmem:[%s5] sm:$0x1]
    %v1739 = vperm.slane %v1737, 0
    %v1742 = vsel %vm42, %v1723, 0
    %v1745 = vsel %vm42, %v1724, 0
    %v1748 = vsel %vm42, %v1725, 0
    %v1751 = vsel %vm42, %v1726, 0
    %v1754 = vsel %vm42, %v1727, 0
    %v1757 = vsel %vm42, %v1728, 0
    %v1760 = vsel %vm42, %v1729, 0
    %v1763 = vsel %vm42, %v1730, 0
    %1765 = vmatpush.bf16.msra.mxu0 0
    %1766 = vmatpush.bf16.msra.mxu0 0
    %1767 = vmatpush.bf16.msra.mxu0 0
    %1768 = vmatpush.bf16.msra.mxu0 0
    %1769 = vmatpush.bf16.msra.mxu0 0
    %1770 = vmatpush.bf16.msra.mxu0 0
    %1771 = vmatpush.bf16.msra.mxu0 %v1736
    %1772 = vmatpush.bf16.msra.mxu0 %v1735
    %1773 = vmatmul.bf16.gmra.mxu0 %v1742
    %v1774 = vpop.f32.mrf.mxu0
    %v1775 = vadd.f32 %v1739, %v1774
    %v1776 = vpop.f32.mrf.mxu0
    %v1777 = vadd.f32 %v1739, %v1776
    %1778 = vmatmul.bf16.gmra.mxu0 %v1745
    %v1779 = vpop.f32.mrf.mxu0
    %v1780 = vadd.f32 %v1739, %v1779
    %v1781 = vpop.f32.mrf.mxu0
    %v1782 = vadd.f32 %v1739, %v1781
    %1783 = vmatmul.bf16.gmra.mxu0 %v1748
    %v1784 = vpop.f32.mrf.mxu0
    %v1785 = vadd.f32 %v1739, %v1784
    %v1786 = vpop.f32.mrf.mxu0
    %v1787 = vadd.f32 %v1739, %v1786
    %1788 = vmatmul.bf16.gmra.mxu0 %v1751
    %v1789 = vpop.f32.mrf.mxu0
    %v1790 = vadd.f32 %v1739, %v1789
    %v1791 = vpop.f32.mrf.mxu0
    %v1792 = vadd.f32 %v1739, %v1791
    %1793 = vmatmul.bf16.gmra.mxu0 %v1754
    %v1794 = vpop.f32.mrf.mxu0
    %v1795 = vadd.f32 %v1739, %v1794
    %v1796 = vpop.f32.mrf.mxu0
    %v1797 = vadd.f32 %v1739, %v1796
    %1798 = vmatmul.bf16.gmra.mxu0 %v1757
    %v1799 = vpop.f32.mrf.mxu0
    %v1800 = vadd.f32 %v1739, %v1799
    %v1801 = vpop.f32.mrf.mxu0
    %v1802 = vadd.f32 %v1739, %v1801
    %1803 = vmatmul.bf16.gmra.mxu0 %v1760
    %v1804 = vpop.f32.mrf.mxu0
    %v1805 = vadd.f32 %v1739, %v1804
    %v1806 = vpop.f32.mrf.mxu0
    %v1807 = vadd.f32 %v1739, %v1806
    %1808 = vmatmul.bf16.gmra.mxu0 %v1763
    %v1809 = vpop.f32.mrf.mxu0
    %v1810 = vadd.f32 %v1739, %v1809
    %v1811 = vpop.f32.mrf.mxu0
    %v1812 = vadd.f32 %v1739, %v1811
    %1813 = vdwg.mxu0
    %1814 = vst [vmem:[%s7] sm:$0xff] %v1775
    %1815 = vst [vmem:[%s7 + $0x8] sm:$0xff] %v1777
    %1816 = vst [vmem:[%s7 + $0x10] sm:$0xff] %v1780
    %1817 = vst [vmem:[%s7 + $0x18] sm:$0xff] %v1782
    %1818 = vst [vmem:[%s7 + $0x20] sm:$0xff] %v1785
    %1819 = vst [vmem:[%s7 + $0x28] sm:$0xff] %v1787
    %1820 = vst [vmem:[%s7 + $0x30] sm:$0xff] %v1790
    %1821 = vst [vmem:[%s7 + $0x38] sm:$0xff] %v1792
    %1822 = vst [vmem:[%s7 + $0x40] sm:$0xff] %v1795
    %1823 = vst [vmem:[%s7 + $0x48] sm:$0xff] %v1797
    %1824 = vst [vmem:[%s7 + $0x50] sm:$0xff] %v1800
    %1825 = vst [vmem:[%s7 + $0x58] sm:$0xff] %v1802
    %1826 = vst [vmem:[%s7 + $0x60] sm:$0xff] %v1805
    %1827 = vst [vmem:[%s7 + $0x68] sm:$0xff] %v1807
    %1828 = vst [vmem:[%s7 + $0x70] sm:$0xff] %v1810
    %1829 = vst [vmem:[%s7 + $0x78] sm:$0xff] %v1812
    // Predicated region
    $region26: #{samaf_pallas.1} parent=1 // pred_check
      _
    $region27: #{samaf_pallas.1} parent=1 // pred_check_branch
      %1831 = sbr.rel (0) target = $region29
    $region28: #{samaf_pallas.1} parent=1 // pred_region
      %1833 = vsyncadd [#allocation4], 0
      %s1834 = sshll.u32 [#allocation3], 4
      %s1835 = int_to_ptr.vmem [resolvable:$true] %s1834
      %s1836 = sshll.u32 %s6, 4
      %s1837 = int_to_ptr.hbm [resolvable:$true] %s1836
      %1842 = dma.vmem_to_hbm [thread:$0]  %s1835, 256, %s1837, [#allocation4], 128, 128, 8
    $region29: #{samaf_pallas.1} parent=1 // pred_fallthru
      _
    // Predicated region
    $region30: #{samaf_pallas.1} parent=1 // pred_check
      _
    $region31: #{samaf_pallas.1} parent=1 // pred_check_branch
      %1844 = sbr.rel (0) target = $region33
    $region32: #{samaf_pallas.1} parent=1 // pred_region
      _
    $region33: #{samaf_pallas.1} parent=1 // pred_fallthru
      _
    // Predicated region
    $region34: #{samaf_pallas.1} parent=1 // pred_check
      _
    $region35: #{samaf_pallas.1} parent=1 // pred_check_branch
      %1846 = sbr.rel (0) target = $region37
    $region36: #{samaf_pallas.1} parent=1 // pred_region
      %1848 = dma.done [#allocation4], 256
    $region37: #{samaf_pallas.1} parent=1 // pred_fallthru
      _
    // Predicated region
    $region38: #{samaf_pallas.1} parent=1 // pred_check
      _
    $region39: #{samaf_pallas.1} parent=1 // pred_check_branch
      %1850 = sbr.rel (0) target = $region41
    $region40: #{samaf_pallas.1} parent=1 // pred_region
      _
    $region41: #{samaf_pallas.1} parent=1 // pred_fallthru
      _
    %1851 = vsyncpa [#allocation4], 1

</llo_original>
